<compile_context>
chip_gen: v7x
topology: tpu7x:2x2x1
jax: 0.10.0
libtpu: 0.0.40
codegen_flags: <defaults>
</compile_context>

<pallas_src>
import functools
import math

import jax
import jax.numpy as jnp
import numpy as np
from jax.experimental import pallas as pl
from jax.experimental.pallas import tpu as pltpu


def _mha_kernel(*refs, heads, head_dim, block_b, seq_len, compute_dtype,
                approx_recip, self_attention):
    """One batch tile (block_b*seq_len rows) per grid step; all refs in VMEM.

    refs (self-attention):  x_ref, w_ref, b_ref, out_ref
    refs (cross-attention): q_ref, k_ref, v_ref, w_ref, b_ref, out_ref
      x/q/k/v/out refs: (block_b*seq_len, D) row blocks (whole batch elements).
      w_ref: (4, D, D) stacked [Wq^T*scale, Wk^T, Wv^T, Wo^T] in (D_in, D_out).
      b_ref: (4, D)    stacked [bq*scale, bk, bv, bo] (f32).
    """
    if self_attention:
        x_ref, w_ref, b_ref, out_ref = refs
        x_q = x_k = x_v = x_ref[...]
    else:
        q_ref, k_ref, v_ref, w_ref, b_ref, out_ref = refs
        x_q, x_k, x_v = q_ref[...], k_ref[...], v_ref[...]

    D = heads * head_dim
    M = block_b * seq_len
    cd = compute_dtype
    bias = b_ref[...]                                     # (4, D) f32

    # Input projections (K=N=D, the full-rate MXU work). f32 accumulation; the
    # 1/sqrt(Dh) scale is already folded into w[0]/bias[0]. Cast to the compute
    # dtype ONCE here, not per head slice.
    q = (jnp.dot(x_q, w_ref[0], preferred_element_type=jnp.float32)
         + bias[0:1, :]).astype(cd).reshape(block_b, seq_len, D)
    k = (jnp.dot(x_k, w_ref[1], preferred_element_type=jnp.float32)
         + bias[1:2, :]).astype(cd).reshape(block_b, seq_len, D)
    v = (jnp.dot(x_v, w_ref[2], preferred_element_type=jnp.float32)
         + bias[2:3, :]).astype(cd).reshape(block_b, seq_len, D)

    wo = w_ref[3]                                         # (D, D) = (D_in, D_out)
    acc = jnp.zeros((M, D), jnp.float32)

    # Per-head attention, batched over the batch tile. Each head's context is
    # folded directly into the output projection: no ctx scratch, no
    # sub-128-lane masked stores.
    for h in range(heads):
        lo = h * head_dim
        q_h = q[:, :, lo:lo + head_dim]                   # (Bt, S, Dh), cd
        k_h = k[:, :, lo:lo + head_dim]
        v_h = v[:, :, lo:lo + head_dim]

        s = jnp.einsum('bqd,bkd->bqk', q_h, k_h,
                       preferred_element_type=jnp.float32)      # (Bt, S, S)
        s = s - jnp.max(s, axis=-1, keepdims=True)
        p = jnp.exp(s)
        p = p * pl.reciprocal(jnp.sum(p, axis=-1, keepdims=True),
                              approx=approx_recip)

        ctx_h = jnp.einsum('bqk,bkd->bqd', p.astype(cd), v_h,
                           preferred_element_type=jnp.float32)  # (Bt, S, Dh)
        acc = acc + jnp.dot(ctx_h.reshape(M, head_dim).astype(cd),
                            wo[lo:lo + head_dim, :],
                            preferred_element_type=jnp.float32)

    out_ref[...] = (acc + bias[3:4, :]).astype(out_ref.dtype)


def _pick_block_b(batch: int, seq: int, target_rows: int = 512) -> int:
    """Largest divisor of `batch` giving ~target_rows matmul rows per grid step.

    Capped at batch//2 (when batch >= 2) so the grid always has >= 2 steps and
    both v7x TensorCores get work under dimension_semantics=("parallel",).
    """
    cap = max(1, min(batch, -(-target_rows // seq)))      # cdiv(target, seq)
    if batch >= 2:
        cap = min(cap, batch // 2)
    cap = max(cap, 1)
    for d in range(cap, 0, -1):
        if batch % d == 0:
            return d
    return 1


def _default_vmem_limit_bytes() -> int:
    """~3/4 of physical VMEM, capped at 96 MiB.

    v7x: 64 MiB physical -> 48 MiB (headroom, avoid spills).
    v5e/v6e: 128 MiB physical (16/32 MiB default scoped) -> 96 MiB.
    """
    try:
        cap = int(pltpu.get_tpu_info().vmem_capacity_bytes)
    except Exception:   # non-TPU trace / older jax: conservative (v7x-safe)
        cap = 64 * 1024 * 1024
    return min(96 * 1024 * 1024, (cap * 3) // 4)


def _const_spec(shape):
    """BlockSpec for a grid-constant input, single-buffered where supported
    (double-buffering a constant weight block buys nothing, doubles VMEM)."""
    index_map = lambda i: (0,) * len(shape)
    try:
        return pl.BlockSpec(shape, index_map, pipeline_mode=pl.Buffered(1))
    except (TypeError, AttributeError):                   # older jax fallback
        return pl.BlockSpec(shape, index_map)


def multi_head_attention(query, key, value, params, *, heads: int,
                         compute_dtype=jnp.float32, block_b=None,
                         vmem_limit_bytes=None):
    """query/key/value: (B, S, D). params: torch-layout nn.Linear weights.

    compute_dtype: matmul-operand dtype. bfloat16 is recommended on ALL TPU
    generations (v5e's MXU is bf16-native too); softmax + accumulation stay in
    f32 either way. Eval mode only: dropout = identity, mask = None.
    """
    B, S, D = query.shape
    assert D % heads == 0
    head_dim = D // heads
    scale = 1.0 / math.sqrt(head_dim)
    compute_dtype = np.dtype(compute_dtype)
    approx_recip = compute_dtype == np.dtype(jnp.bfloat16)

    self_attention = (query is key) and (key is value)

    if block_b is None:
        block_b = _pick_block_b(B, S)
    assert B % block_b == 0
    if vmem_limit_bytes is None:
        vmem_limit_bytes = _default_vmem_limit_bytes()

    # One-time layout plumbing (outside the kernel): transpose each weight to
    # (D_in, D_out), fold the 1/sqrt(Dh) scale into the Q projection, and stack
    # weights / biases so the kernel sees 2 grid-constant inputs, not 8.
    w_all = jnp.stack([params["wq"].T * scale,
                       params["wk"].T,
                       params["wv"].T,
                       params["wo"].T]).astype(compute_dtype)         # (4, D, D)
    b_all = jnp.stack([params["bq"] * scale,
                       params["bk"],
                       params["bv"],
                       params["bo"]]).astype(jnp.float32)             # (4, D)

    rows = block_b * S
    x_spec = pl.BlockSpec((rows, D), lambda i: (i, 0))
    w_spec = _const_spec((4, D, D))
    b_spec = _const_spec((4, D))

    if self_attention:
        # DMA / buffer the shared input once per grid step instead of 3x.
        inputs = (query.reshape(B * S, D).astype(compute_dtype), w_all, b_all)
        in_specs = [x_spec, w_spec, b_spec]
    else:
        inputs = (query.reshape(B * S, D).astype(compute_dtype),
                  key.reshape(B * S, D).astype(compute_dtype),
                  value.reshape(B * S, D).astype(compute_dtype),
                  w_all, b_all)
        in_specs = [x_spec, x_spec, x_spec, w_spec, b_spec]

    kernel = functools.partial(
        _mha_kernel, heads=heads, head_dim=head_dim, block_b=block_b,
        seq_len=S, compute_dtype=compute_dtype,
        approx_recip=bool(approx_recip), self_attention=self_attention)

    out = pl.pallas_call(
        kernel,
        out_shape=jax.ShapeDtypeStruct((B * S, D), query.dtype),
        grid_spec=pltpu.PrefetchScalarGridSpec(
            num_scalar_prefetch=0,
            grid=(B // block_b,),
            in_specs=in_specs,
            out_specs=x_spec),
        compiler_params=pltpu.CompilerParams(
            dimension_semantics=("parallel",),
            vmem_limit_bytes=int(vmem_limit_bytes)),
    )(*inputs)
    return out.reshape(B, S, D)


def _reference_mha(query, key, value, params, *, heads: int):
    """Pure-JAX reference mirroring the PyTorch module (eval mode, mask=None)."""
    B, S, D = query.shape
    Dh = D // heads
    hp = jax.lax.Precision.HIGHEST

    def lin(x, w, b):
        return jnp.einsum("bsd,od->bso", x, w, precision=hp) + b

    q = lin(query, params["wq"], params["bq"]).reshape(B, S, heads, Dh).transpose(0, 2, 1, 3)
    k = lin(key, params["wk"], params["bk"]).reshape(B, S, heads, Dh).transpose(0, 2, 1, 3)
    v = lin(value, params["wv"], params["bv"]).reshape(B, S, heads, Dh).transpose(0, 2, 1, 3)

    scores = jnp.einsum("bhqd,bhkd->bhqk", q, k, precision=hp) / math.sqrt(Dh)
    p = jax.nn.softmax(scores, axis=-1)
    ctx = jnp.einsum("bhqk,bhkd->bhqd", p, v, precision=hp)
    ctx = ctx.transpose(0, 2, 1, 3).reshape(B, S, D)
    return jnp.einsum("bsd,od->bso", ctx, params["wo"], precision=hp) + params["bo"]


if __name__ == "__main__":
    # Small shapes consistent with the module: batch=2, seq=8, hidden=32, heads=4.
    B, S, D, H = 2, 8, 32, 4

    key0 = jax.random.PRNGKey(0)
    keys = jax.random.split(key0, 16)

    # Deterministic nn.Linear-like init: uniform(-1/sqrt(D), 1/sqrt(D)).
    bound = 1.0 / math.sqrt(D)
    params = {
        "wq": jax.random.uniform(keys[0], (D, D), jnp.float32, -bound, bound),
        "bq": jax.random.uniform(keys[1], (D,), jnp.float32, -bound, bound),
        "wk": jax.random.uniform(keys[2], (D, D), jnp.float32, -bound, bound),
        "bk": jax.random.uniform(keys[3], (D,), jnp.float32, -bound, bound),
        "wv": jax.random.uniform(keys[4], (D, D), jnp.float32, -bound, bound),
        "bv": jax.random.uniform(keys[5], (D,), jnp.float32, -bound, bound),
        "wo": jax.random.uniform(keys[6], (D, D), jnp.float32, -bound, bound),
        "bo": jax.random.uniform(keys[7], (D,), jnp.float32, -bound, bound),
    }

    query = jax.random.normal(keys[8], (B, S, D), jnp.float32)
    key_in = jax.random.normal(keys[9], (B, S, D), jnp.float32)
    value = jax.random.normal(keys[10], (B, S, D), jnp.float32)

    # 1) f32 path, distinct q/k/v (general cross-attention arity).
    ref = _reference_mha(query, key_in, value, params, heads=H)
    out = jax.block_until_ready(
        multi_head_attention(query, key_in, value, params, heads=H))
    np.testing.assert_allclose(np.asarray(out), np.asarray(ref),
                               rtol=2e-4, atol=2e-4)

    # 2) Self-attention fast path (q is k is v -> single deduplicated input).
    ref_self = _reference_mha(query, query, query, params, heads=H)
    out_self = jax.block_until_ready(
        multi_head_attention(query, query, query, params, heads=H))
    np.testing.assert_allclose(np.asarray(out_self), np.asarray(ref_self),
                               rtol=2e-4, atol=2e-4)

    # 3) bf16 MXU-operand path (recommended on v5e/v6e/v7x); softmax and
    #    accumulation stay f32, so only operand rounding differs.
    out_bf16 = jax.block_until_ready(
        multi_head_attention(query, key_in, value, params, heads=H,
                             compute_dtype=jnp.bfloat16))
    np.testing.assert_allclose(np.asarray(out_bf16), np.asarray(ref),
                               rtol=0.1, atol=0.3)

    print("KERNEL_OK")
</pallas_src>

<mosaic_0001>
module attributes {stable_mosaic.version = 11 : i64} {
  func.func @_mha_kernel(%arg0: i32, %arg1: memref<8x32xf32, #tpu.memory_space<vmem>>, %arg2: memref<8x32xf32, #tpu.memory_space<vmem>>, %arg3: memref<8x32xf32, #tpu.memory_space<vmem>>, %arg4: memref<4x32x32xf32, #tpu.memory_space<vmem>>, %arg5: memref<4x32xf32, #tpu.memory_space<vmem>>, %arg6: memref<8x32xf32, #tpu.memory_space<vmem>>) attributes {dimension_semantics = [#tpu.dimension_semantics<parallel>], iteration_bounds = array<i64: 2>, scalar_prefetch = 0 : i64, scratch_operands = 0 : i64, tpu.core_type = #tpu.core_type<tc>, window_params = [{transform_indices = @transform_0, window_bounds = array<i64: 8, 32>}, {transform_indices = @transform_1, window_bounds = array<i64: 8, 32>}, {transform_indices = @transform_2, window_bounds = array<i64: 8, 32>}, {pipeline_mode = #tpu.pipeline_mode<synchronous>, transform_indices = @transform_3, window_bounds = array<i64: 4, 32, 32>}, {pipeline_mode = #tpu.pipeline_mode<synchronous>, transform_indices = @transform_4, window_bounds = array<i64: 4, 32>}, {transform_indices = @transform_5, window_bounds = array<i64: 8, 32>}]} {
    %c0 = arith.constant 0 : index
    %c0_0 = arith.constant 0 : index
    %0 = vector.load %arg1[%c0, %c0_0] : memref<8x32xf32, #tpu.memory_space<vmem>>, vector<8x32xf32>
    %c0_1 = arith.constant 0 : index
    %c0_2 = arith.constant 0 : index
    %1 = vector.load %arg2[%c0_1, %c0_2] : memref<8x32xf32, #tpu.memory_space<vmem>>, vector<8x32xf32>
    %c0_3 = arith.constant 0 : index
    %c0_4 = arith.constant 0 : index
    %2 = vector.load %arg3[%c0_3, %c0_4] : memref<8x32xf32, #tpu.memory_space<vmem>>, vector<8x32xf32>
    %c0_5 = arith.constant 0 : index
    %c0_6 = arith.constant 0 : index
    %3 = vector.load %arg5[%c0_5, %c0_6] : memref<4x32xf32, #tpu.memory_space<vmem>>, vector<4x32xf32>
    %c0_7 = arith.constant 0 : index
    %c0_8 = arith.constant 0 : index
    %c0_9 = arith.constant 0 : index
    %4 = vector.load %arg4[%c0_7, %c0_8, %c0_9] : memref<4x32x32xf32, #tpu.memory_space<vmem>>, vector<1x32x32xf32>
    %5 = vector.shape_cast %4 : vector<1x32x32xf32> to vector<32x32xf32>
    %cst = arith.constant dense<0.000000e+00> : vector<8x32xf32>
    %6 = tpu.matmul %0, %5, %cst {dimension_numbers = #tpu.dot_dimension_numbers<[1], [0], [0], [1], [0, 0, 1, 1], [], []>} : vector<8x32xf32>, vector<32x32xf32>, vector<8x32xf32> -> vector<8x32xf32>
    %7 = vector.extract_strided_slice %3 {offsets = [0, 0], sizes = [1, 32], strides = [1, 1]} : vector<4x32xf32> to vector<1x32xf32>
    %8 = vector.broadcast %7 : vector<1x32xf32> to vector<8x32xf32>
    %9 = arith.addf %6, %8 : vector<8x32xf32>
    %10 = vector.shape_cast %9 : vector<8x32xf32> to vector<1x8x32xf32>
    %c1 = arith.constant 1 : index
    %c0_10 = arith.constant 0 : index
    %c0_11 = arith.constant 0 : index
    %11 = vector.load %arg4[%c1, %c0_10, %c0_11] : memref<4x32x32xf32, #tpu.memory_space<vmem>>, vector<1x32x32xf32>
    %12 = vector.shape_cast %11 : vector<1x32x32xf32> to vector<32x32xf32>
    %cst_12 = arith.constant dense<0.000000e+00> : vector<8x32xf32>
    %13 = tpu.matmul %1, %12, %cst_12 {dimension_numbers = #tpu.dot_dimension_numbers<[1], [0], [0], [1], [0, 0, 1, 1], [], []>} : vector<8x32xf32>, vector<32x32xf32>, vector<8x32xf32> -> vector<8x32xf32>
    %14 = vector.extract_strided_slice %3 {offsets = [1, 0], sizes = [1, 32], strides = [1, 1]} : vector<4x32xf32> to vector<1x32xf32>
    %15 = vector.broadcast %14 : vector<1x32xf32> to vector<8x32xf32>
    %16 = arith.addf %13, %15 : vector<8x32xf32>
    %17 = vector.shape_cast %16 : vector<8x32xf32> to vector<1x8x32xf32>
    %c2 = arith.constant 2 : index
    %c0_13 = arith.constant 0 : index
    %c0_14 = arith.constant 0 : index
    %18 = vector.load %arg4[%c2, %c0_13, %c0_14] : memref<4x32x32xf32, #tpu.memory_space<vmem>>, vector<1x32x32xf32>
    %19 = vector.shape_cast %18 : vector<1x32x32xf32> to vector<32x32xf32>
    %cst_15 = arith.constant dense<0.000000e+00> : vector<8x32xf32>
    %20 = tpu.matmul %2, %19, %cst_15 {dimension_numbers = #tpu.dot_dimension_numbers<[1], [0], [0], [1], [0, 0, 1, 1], [], []>} : vector<8x32xf32>, vector<32x32xf32>, vector<8x32xf32> -> vector<8x32xf32>
    %21 = vector.extract_strided_slice %3 {offsets = [2, 0], sizes = [1, 32], strides = [1, 1]} : vector<4x32xf32> to vector<1x32xf32>
    %22 = vector.broadcast %21 : vector<1x32xf32> to vector<8x32xf32>
    %23 = arith.addf %20, %22 : vector<8x32xf32>
    %24 = vector.shape_cast %23 : vector<8x32xf32> to vector<1x8x32xf32>
    %c3 = arith.constant 3 : index
    %c0_16 = arith.constant 0 : index
    %c0_17 = arith.constant 0 : index
    %25 = vector.load %arg4[%c3, %c0_16, %c0_17] : memref<4x32x32xf32, #tpu.memory_space<vmem>>, vector<1x32x32xf32>
    %26 = vector.shape_cast %25 : vector<1x32x32xf32> to vector<32x32xf32>
    %cst_18 = arith.constant 0.000000e+00 : f32
    %27 = vector.broadcast %cst_18 : f32 to vector<8x32xf32>
    %28 = vector.extract_strided_slice %10 {offsets = [0, 0, 0], sizes = [1, 8, 8], strides = [1, 1, 1]} : vector<1x8x32xf32> to vector<1x8x8xf32>
    %29 = vector.extract_strided_slice %17 {offsets = [0, 0, 0], sizes = [1, 8, 8], strides = [1, 1, 1]} : vector<1x8x32xf32> to vector<1x8x8xf32>
    %30 = vector.extract_strided_slice %24 {offsets = [0, 0, 0], sizes = [1, 8, 8], strides = [1, 1, 1]} : vector<1x8x32xf32> to vector<1x8x8xf32>
    "tpu.trace_start"() <{level = 10 : i32, message = "bqd,bkd->bqk"}> : () -> ()
    %cst_19 = arith.constant dense<0.000000e+00> : vector<1x8x8xf32>
    %31 = tpu.matmul %28, %29, %cst_19 {dimension_numbers = #tpu.dot_dimension_numbers<[2], [2], [1], [1], [0, 0, 0, 1, 1, 1], [0], [0]>} : vector<1x8x8xf32>, vector<1x8x8xf32>, vector<1x8x8xf32> -> vector<1x8x8xf32>
    "tpu.trace_stop"() : () -> ()
    %cst_20 = arith.constant dense<0xFF800000> : vector<1x8xf32>
    %32 = vector.multi_reduction <maximumf>, %31, %cst_20 [2] : vector<1x8x8xf32> to vector<1x8xf32>
    %33 = vector.shape_cast %32 : vector<1x8xf32> to vector<1x8x1xf32>
    %34 = vector.broadcast %33 : vector<1x8x1xf32> to vector<1x8x8xf32>
    %35 = arith.subf %31, %34 : vector<1x8x8xf32>
    %36 = math.exp %35 : vector<1x8x8xf32>
    %cst_21 = arith.constant dense<0.000000e+00> : vector<1x8xf32>
    %37 = vector.multi_reduction <add>, %36, %cst_21 [2] : vector<1x8x8xf32> to vector<1x8xf32>
    %38 = vector.shape_cast %37 : vector<1x8xf32> to vector<1x8x1xf32>
    %39 = tpu.reciprocal %38 : vector<1x8x1xf32> -> vector<1x8x1xf32>
    %40 = vector.broadcast %39 : vector<1x8x1xf32> to vector<1x8x8xf32>
    %41 = arith.mulf %36, %40 : vector<1x8x8xf32>
    "tpu.trace_start"() <{level = 10 : i32, message = "bqk,bkd->bqd"}> : () -> ()
    %cst_22 = arith.constant dense<0.000000e+00> : vector<1x8x8xf32>
    %42 = tpu.matmul %41, %30, %cst_22 {dimension_numbers = #tpu.dot_dimension_numbers<[2], [1], [1], [2], [0, 0, 0, 1, 1, 2], [0], [0]>} : vector<1x8x8xf32>, vector<1x8x8xf32>, vector<1x8x8xf32> -> vector<1x8x8xf32>
    "tpu.trace_stop"() : () -> ()
    %43 = vector.shape_cast %42 : vector<1x8x8xf32> to vector<8x8xf32>
    %44 = vector.extract_strided_slice %26 {offsets = [0, 0], sizes = [8, 32], strides = [1, 1]} : vector<32x32xf32> to vector<8x32xf32>
    %cst_23 = arith.constant dense<0.000000e+00> : vector<8x32xf32>
    %45 = tpu.matmul %43, %44, %cst_23 {dimension_numbers = #tpu.dot_dimension_numbers<[1], [0], [0], [1], [0, 0, 1, 1], [], []>} : vector<8x8xf32>, vector<8x32xf32>, vector<8x32xf32> -> vector<8x32xf32>
    %46 = arith.addf %27, %45 : vector<8x32xf32>
    %47 = vector.extract_strided_slice %10 {offsets = [0, 0, 8], sizes = [1, 8, 8], strides = [1, 1, 1]} : vector<1x8x32xf32> to vector<1x8x8xf32>
    %48 = vector.extract_strided_slice %17 {offsets = [0, 0, 8], sizes = [1, 8, 8], strides = [1, 1, 1]} : vector<1x8x32xf32> to vector<1x8x8xf32>
    %49 = vector.extract_strided_slice %24 {offsets = [0, 0, 8], sizes = [1, 8, 8], strides = [1, 1, 1]} : vector<1x8x32xf32> to vector<1x8x8xf32>
    "tpu.trace_start"() <{level = 10 : i32, message = "bqd,bkd->bqk"}> : () -> ()
    %cst_24 = arith.constant dense<0.000000e+00> : vector<1x8x8xf32>
    %50 = tpu.matmul %47, %48, %cst_24 {dimension_numbers = #tpu.dot_dimension_numbers<[2], [2], [1], [1], [0, 0, 0, 1, 1, 1], [0], [0]>} : vector<1x8x8xf32>, vector<1x8x8xf32>, vector<1x8x8xf32> -> vector<1x8x8xf32>
    "tpu.trace_stop"() : () -> ()
    %cst_25 = arith.constant dense<0xFF800000> : vector<1x8xf32>
    %51 = vector.multi_reduction <maximumf>, %50, %cst_25 [2] : vector<1x8x8xf32> to vector<1x8xf32>
    %52 = vector.shape_cast %51 : vector<1x8xf32> to vector<1x8x1xf32>
    %53 = vector.broadcast %52 : vector<1x8x1xf32> to vector<1x8x8xf32>
    %54 = arith.subf %50, %53 : vector<1x8x8xf32>
    %55 = math.exp %54 : vector<1x8x8xf32>
    %cst_26 = arith.constant dense<0.000000e+00> : vector<1x8xf32>
    %56 = vector.multi_reduction <add>, %55, %cst_26 [2] : vector<1x8x8xf32> to vector<1x8xf32>
    %57 = vector.shape_cast %56 : vector<1x8xf32> to vector<1x8x1xf32>
    %58 = tpu.reciprocal %57 : vector<1x8x1xf32> -> vector<1x8x1xf32>
    %59 = vector.broadcast %58 : vector<1x8x1xf32> to vector<1x8x8xf32>
    %60 = arith.mulf %55, %59 : vector<1x8x8xf32>
    "tpu.trace_start"() <{level = 10 : i32, message = "bqk,bkd->bqd"}> : () -> ()
    %cst_27 = arith.constant dense<0.000000e+00> : vector<1x8x8xf32>
    %61 = tpu.matmul %60, %49, %cst_27 {dimension_numbers = #tpu.dot_dimension_numbers<[2], [1], [1], [2], [0, 0, 0, 1, 1, 2], [0], [0]>} : vector<1x8x8xf32>, vector<1x8x8xf32>, vector<1x8x8xf32> -> vector<1x8x8xf32>
    "tpu.trace_stop"() : () -> ()
    %62 = vector.shape_cast %61 : vector<1x8x8xf32> to vector<8x8xf32>
    %63 = vector.extract_strided_slice %26 {offsets = [8, 0], sizes = [8, 32], strides = [1, 1]} : vector<32x32xf32> to vector<8x32xf32>
    %cst_28 = arith.constant dense<0.000000e+00> : vector<8x32xf32>
    %64 = tpu.matmul %62, %63, %cst_28 {dimension_numbers = #tpu.dot_dimension_numbers<[1], [0], [0], [1], [0, 0, 1, 1], [], []>} : vector<8x8xf32>, vector<8x32xf32>, vector<8x32xf32> -> vector<8x32xf32>
    %65 = arith.addf %46, %64 : vector<8x32xf32>
    %66 = vector.extract_strided_slice %10 {offsets = [0, 0, 16], sizes = [1, 8, 8], strides = [1, 1, 1]} : vector<1x8x32xf32> to vector<1x8x8xf32>
    %67 = vector.extract_strided_slice %17 {offsets = [0, 0, 16], sizes = [1, 8, 8], strides = [1, 1, 1]} : vector<1x8x32xf32> to vector<1x8x8xf32>
    %68 = vector.extract_strided_slice %24 {offsets = [0, 0, 16], sizes = [1, 8, 8], strides = [1, 1, 1]} : vector<1x8x32xf32> to vector<1x8x8xf32>
    "tpu.trace_start"() <{level = 10 : i32, message = "bqd,bkd->bqk"}> : () -> ()
    %cst_29 = arith.constant dense<0.000000e+00> : vector<1x8x8xf32>
    %69 = tpu.matmul %66, %67, %cst_29 {dimension_numbers = #tpu.dot_dimension_numbers<[2], [2], [1], [1], [0, 0, 0, 1, 1, 1], [0], [0]>} : vector<1x8x8xf32>, vector<1x8x8xf32>, vector<1x8x8xf32> -> vector<1x8x8xf32>
    "tpu.trace_stop"() : () -> ()
    %cst_30 = arith.constant dense<0xFF800000> : vector<1x8xf32>
    %70 = vector.multi_reduction <maximumf>, %69, %cst_30 [2] : vector<1x8x8xf32> to vector<1x8xf32>
    %71 = vector.shape_cast %70 : vector<1x8xf32> to vector<1x8x1xf32>
    %72 = vector.broadcast %71 : vector<1x8x1xf32> to vector<1x8x8xf32>
    %73 = arith.subf %69, %72 : vector<1x8x8xf32>
    %74 = math.exp %73 : vector<1x8x8xf32>
    %cst_31 = arith.constant dense<0.000000e+00> : vector<1x8xf32>
    %75 = vector.multi_reduction <add>, %74, %cst_31 [2] : vector<1x8x8xf32> to vector<1x8xf32>
    %76 = vector.shape_cast %75 : vector<1x8xf32> to vector<1x8x1xf32>
    %77 = tpu.reciprocal %76 : vector<1x8x1xf32> -> vector<1x8x1xf32>
    %78 = vector.broadcast %77 : vector<1x8x1xf32> to vector<1x8x8xf32>
    %79 = arith.mulf %74, %78 : vector<1x8x8xf32>
    "tpu.trace_start"() <{level = 10 : i32, message = "bqk,bkd->bqd"}> : () -> ()
    %cst_32 = arith.constant dense<0.000000e+00> : vector<1x8x8xf32>
    %80 = tpu.matmul %79, %68, %cst_32 {dimension_numbers = #tpu.dot_dimension_numbers<[2], [1], [1], [2], [0, 0, 0, 1, 1, 2], [0], [0]>} : vector<1x8x8xf32>, vector<1x8x8xf32>, vector<1x8x8xf32> -> vector<1x8x8xf32>
    "tpu.trace_stop"() : () -> ()
    %81 = vector.shape_cast %80 : vector<1x8x8xf32> to vector<8x8xf32>
    %82 = vector.extract_strided_slice %26 {offsets = [16, 0], sizes = [8, 32], strides = [1, 1]} : vector<32x32xf32> to vector<8x32xf32>
    %cst_33 = arith.constant dense<0.000000e+00> : vector<8x32xf32>
    %83 = tpu.matmul %81, %82, %cst_33 {dimension_numbers = #tpu.dot_dimension_numbers<[1], [0], [0], [1], [0, 0, 1, 1], [], []>} : vector<8x8xf32>, vector<8x32xf32>, vector<8x32xf32> -> vector<8x32xf32>
    %84 = arith.addf %65, %83 : vector<8x32xf32>
    %85 = vector.extract_strided_slice %10 {offsets = [0, 0, 24], sizes = [1, 8, 8], strides = [1, 1, 1]} : vector<1x8x32xf32> to vector<1x8x8xf32>
    %86 = vector.extract_strided_slice %17 {offsets = [0, 0, 24], sizes = [1, 8, 8], strides = [1, 1, 1]} : vector<1x8x32xf32> to vector<1x8x8xf32>
    %87 = vector.extract_strided_slice %24 {offsets = [0, 0, 24], sizes = [1, 8, 8], strides = [1, 1, 1]} : vector<1x8x32xf32> to vector<1x8x8xf32>
    "tpu.trace_start"() <{level = 10 : i32, message = "bqd,bkd->bqk"}> : () -> ()
    %cst_34 = arith.constant dense<0.000000e+00> : vector<1x8x8xf32>
    %88 = tpu.matmul %85, %86, %cst_34 {dimension_numbers = #tpu.dot_dimension_numbers<[2], [2], [1], [1], [0, 0, 0, 1, 1, 1], [0], [0]>} : vector<1x8x8xf32>, vector<1x8x8xf32>, vector<1x8x8xf32> -> vector<1x8x8xf32>
    "tpu.trace_stop"() : () -> ()
    %cst_35 = arith.constant dense<0xFF800000> : vector<1x8xf32>
    %89 = vector.multi_reduction <maximumf>, %88, %cst_35 [2] : vector<1x8x8xf32> to vector<1x8xf32>
    %90 = vector.shape_cast %89 : vector<1x8xf32> to vector<1x8x1xf32>
    %91 = vector.broadcast %90 : vector<1x8x1xf32> to vector<1x8x8xf32>
    %92 = arith.subf %88, %91 : vector<1x8x8xf32>
    %93 = math.exp %92 : vector<1x8x8xf32>
    %cst_36 = arith.constant dense<0.000000e+00> : vector<1x8xf32>
    %94 = vector.multi_reduction <add>, %93, %cst_36 [2] : vector<1x8x8xf32> to vector<1x8xf32>
    %95 = vector.shape_cast %94 : vector<1x8xf32> to vector<1x8x1xf32>
    %96 = tpu.reciprocal %95 : vector<1x8x1xf32> -> vector<1x8x1xf32>
    %97 = vector.broadcast %96 : vector<1x8x1xf32> to vector<1x8x8xf32>
    %98 = arith.mulf %93, %97 : vector<1x8x8xf32>
    "tpu.trace_start"() <{level = 10 : i32, message = "bqk,bkd->bqd"}> : () -> ()
    %cst_37 = arith.constant dense<0.000000e+00> : vector<1x8x8xf32>
    %99 = tpu.matmul %98, %87, %cst_37 {dimension_numbers = #tpu.dot_dimension_numbers<[2], [1], [1], [2], [0, 0, 0, 1, 1, 2], [0], [0]>} : vector<1x8x8xf32>, vector<1x8x8xf32>, vector<1x8x8xf32> -> vector<1x8x8xf32>
    "tpu.trace_stop"() : () -> ()
    %100 = vector.shape_cast %99 : vector<1x8x8xf32> to vector<8x8xf32>
    %101 = vector.extract_strided_slice %26 {offsets = [24, 0], sizes = [8, 32], strides = [1, 1]} : vector<32x32xf32> to vector<8x32xf32>
    %cst_38 = arith.constant dense<0.000000e+00> : vector<8x32xf32>
    %102 = tpu.matmul %100, %101, %cst_38 {dimension_numbers = #tpu.dot_dimension_numbers<[1], [0], [0], [1], [0, 0, 1, 1], [], []>} : vector<8x8xf32>, vector<8x32xf32>, vector<8x32xf32> -> vector<8x32xf32>
    %103 = arith.addf %84, %102 : vector<8x32xf32>
    %104 = vector.extract_strided_slice %3 {offsets = [3, 0], sizes = [1, 32], strides = [1, 1]} : vector<4x32xf32> to vector<1x32xf32>
    %105 = vector.broadcast %104 : vector<1x32xf32> to vector<8x32xf32>
    %106 = arith.addf %103, %105 : vector<8x32xf32>
    %c0_39 = arith.constant 0 : index
    %c0_40 = arith.constant 0 : index
    %107 = vector.load %arg6[%c0_39, %c0_40] : memref<8x32xf32, #tpu.memory_space<vmem>>, vector<8x32xf32>
    tpu.vector_store %arg6[%c0_39, %c0_40], %106 {strides = array<i32>} : memref<8x32xf32, #tpu.memory_space<vmem>>, vector<8x32xf32>,
    return
  }
  func.func @transform_0(%arg0: i32) -> (i32, i32) {
    %c0_i32 = arith.constant 0 : i32
    %c0_i32_0 = arith.constant 0 : i32
    return %arg0, %c0_i32 : i32, i32
  }
  func.func @transform_1(%arg0: i32) -> (i32, i32) {
    %c0_i32 = arith.constant 0 : i32
    %c0_i32_0 = arith.constant 0 : i32
    return %arg0, %c0_i32 : i32, i32
  }
  func.func @transform_2(%arg0: i32) -> (i32, i32) {
    %c0_i32 = arith.constant 0 : i32
    %c0_i32_0 = arith.constant 0 : i32
    return %arg0, %c0_i32 : i32, i32
  }
  func.func @transform_3(%arg0: i32) -> (i32, i32, i32) {
    %c0_i32 = arith.constant 0 : i32
    %c0_i32_0 = arith.constant 0 : i32
    %c0_i32_1 = arith.constant 0 : i32
    %c0_i32_2 = arith.constant 0 : i32
    return %c0_i32, %c0_i32_0, %c0_i32_1 : i32, i32, i32
  }
  func.func @transform_4(%arg0: i32) -> (i32, i32) {
    %c0_i32 = arith.constant 0 : i32
    %c0_i32_0 = arith.constant 0 : i32
    %c0_i32_1 = arith.constant 0 : i32
    return %c0_i32, %c0_i32_0 : i32, i32
  }
  func.func @transform_5(%arg0: i32) -> (i32, i32) {
    %c0_i32 = arith.constant 0 : i32
    %c0_i32_0 = arith.constant 0 : i32
    return %arg0, %c0_i32 : i32, i32
  }
}

</mosaic_0001>

<llo_original>
// kernel: tpu_custom_call.1
$region0: #{tpu_custom_call.1}
  #allocation0 [shape = 'u32[]', space=smem, size = 0x4, offset = 0x4, fixed_abs, tag = 'smem constant byte address 0x4 - core index']
  #allocation1 [shape = 'u32[144,128]{1,0:T(1,128)}', space=vmem, size = 0x12000, scoped, tag = 'internal scratch']
  %s0 = inlined_call_operand.hbm [shape: f32[16,32], index: 0, kind: input, shape index: {}]
  %s1 = inlined_call_operand.hbm [shape: f32[16,32], index: 1, kind: input, shape index: {}]
  %s2 = inlined_call_operand.hbm [shape: f32[16,32], index: 2, kind: input, shape index: {}]
  %s3 = inlined_call_operand.hbm [shape: f32[4,32,32], index: 3, kind: input, shape index: {}]
  %s4 = inlined_call_operand.vmem [shape: f32[4,32], index: 4, kind: input, shape index: {}]
  %s5 = inlined_call_operand.hbm [shape: f32[16,32], index: 5, kind: output, shape index: {}]
  %s6 = sld [smem:[#allocation0]]
  $region69: #{tpu_custom_call.1} parent=0
    _
  %s8 = ssub.s32 1, %s6
  %s9 = scalar_select 0, %s8, %s6
  $region1: #{tpu_custom_call.1} parent=0
    #allocation2 [shape = 'u8[8192]{0}', space=vmem, size = 0x2000, scoped, tag = 'input window, operand 0']
    #allocation3 [shape = 's32[2]{0}', space=sflag, size = 0x8, scoped, tag = 'scoped memory for tpu_custom_call.1']
    #allocation4 [shape = 's32[2]{0}', space=sflag, size = 0x8, scoped, tag = 'scoped memory for tpu_custom_call.1']
    #allocation5 [shape = 'u8[8192]{0}', space=vmem, size = 0x2000, scoped, tag = 'input window, operand 1']
    #allocation6 [shape = 's32[2]{0}', space=sflag, size = 0x8, scoped, tag = 'scoped memory for tpu_custom_call.1']
    #allocation7 [shape = 'u8[8192]{0}', space=vmem, size = 0x2000, scoped, tag = 'input window, operand 2']
    #allocation8 [shape = 'u8[65536]{0}', space=vmem, size = 0x10000, scoped, tag = 'input window, operand 3, single buffered']
    #allocation9 [shape = 's32[1]{0}', space=sflag, size = 0x4, scoped, tag = 'scoped memory for tpu_custom_call.1']
    #allocation10 [shape = 'u8[8192]{0}', space=vmem, size = 0x2000, scoped, tag = 'output window, operand 0']
    %10 = vsyncpa [#allocation3], 0
    %s11 = scalar_lea.sflag [#allocation3], 1
    %12 = vsyncpa %s11, 0
    %13 = vsyncpa [#allocation6], 0
    %s14 = scalar_lea.sflag [#allocation6], 1
    %15 = vsyncpa %s14, 0
    %16 = vsyncpa [#allocation9], 0
    %17 = vsyncpa [#allocation4], 0
    %s18 = scalar_lea.sflag [#allocation4], 1
    %19 = vsyncpa %s18, 0
    loop: start=0, step=1, limit=4
    $region2: #{tpu_custom_call.1} parent=1 // loop_pre_header
      _
    $region3: #{tpu_custom_call.1} parent=1 // loop_header
      %s21 = sphi 0, %s25
      %p22 = scmp.ge.s32.totalorder %s21, 4
      %s31 = sphi 0, %s33
      %s34 = sphi 0, %s31
      %s35 = sphi 0, %s34
      %s51 = sphi 0, %s35
      %s57 = sphi 0, %s59
      %s60 = sphi 0, %s57
      %s61 = sphi 0, %s60
      %s77 = sphi 0, %s61
      %s83 = sphi 0, %s85
      %s86 = sphi 0, %s83
      %s87 = sphi 0, %s86
      %s103 = sphi 0, %s87
      %s107 = sphi 0, %s107
      %s109 = sphi 0, %s107
      %s110 = sphi 0, %s109
      %s124 = sphi 0, %s110
      %s128 = sphi 0, %s128
      %s130 = sphi 0, %s128
      %s131 = sphi 0, %s130
      %s145 = sphi 0, %s131
      %s151 = sphi 0, %s153
      %s154 = sphi 0, %s151
      %s155 = sphi 0, %s154
      %s171 = sphi 0, %s155
    $region4: #{tpu_custom_call.1} parent=1 // loop_header_branch
      %24 = sbr.rel (%p22) target = $region8
    $region5: #{tpu_custom_call.1} parent=1 // loop_body
      %s26 = ssub.s32 %s21, 1
      %s27 = ssub.s32 %s21, 2
      %s28 = sadd.s32 %s21, 1
      %s29 = ssub.s32 %s21, %s28
      %p30 = scmp.eq.s32.totalorder %s29, 0
      %s32 = sadd.s32 %s31, 1
      %s33 = scalar_select %p30, %s31, %s32
      %p36 = pneg %p30
      %p37 = scmp.eq.s32.totalorder %s21, 1
      %p38 = por %p36, %p37
      %p39 = scmp.ne.s32.totalorder %s31, %s34
      %p40 = scmp.eq.s32.totalorder %s21, 0
      %p41 = por %p39, %p40
      %p42 = scmp.ne.s32.totalorder %s31, %s34
      %p43 = scmp.eq.s32.totalorder %s26, 1
      %p44 = por %p42, %p43
      %p45 = scmp.ne.s32.totalorder %s34, %s35
      %p46 = scmp.eq.s32.totalorder %s26, 0
      %p47 = por %p45, %p46
      %p48 = scmp.ne.s32.totalorder %s34, %s35
      %p49 = scmp.eq.s32.totalorder %s27, 1
      %p50 = por %p48, %p49
      %p52 = scmp.ne.s32.totalorder %s35, %s51
      %p53 = scmp.eq.s32.totalorder %s27, 0
      %p54 = por %p52, %p53
      %s55 = ssub.s32 %s21, %s28
      %p56 = scmp.eq.s32.totalorder %s55, 0
      %s58 = sadd.s32 %s57, 1
      %s59 = scalar_select %p56, %s57, %s58
      %p62 = pneg %p56
      %p63 = scmp.eq.s32.totalorder %s21, 1
      %p64 = por %p62, %p63
      %p65 = scmp.ne.s32.totalorder %s57, %s60
      %p66 = scmp.eq.s32.totalorder %s21, 0
      %p67 = por %p65, %p66
      %p68 = scmp.ne.s32.totalorder %s57, %s60
      %p69 = scmp.eq.s32.totalorder %s26, 1
      %p70 = por %p68, %p69
      %p71 = scmp.ne.s32.totalorder %s60, %s61
      %p72 = scmp.eq.s32.totalorder %s26, 0
      %p73 = por %p71, %p72
      %p74 = scmp.ne.s32.totalorder %s60, %s61
      %p75 = scmp.eq.s32.totalorder %s27, 1
      %p76 = por %p74, %p75
      %p78 = scmp.ne.s32.totalorder %s61, %s77
      %p79 = scmp.eq.s32.totalorder %s27, 0
      %p80 = por %p78, %p79
      %s81 = ssub.s32 %s21, %s28
      %p82 = scmp.eq.s32.totalorder %s81, 0
      %s84 = sadd.s32 %s83, 1
      %s85 = scalar_select %p82, %s83, %s84
      %p88 = pneg %p82
      %p89 = scmp.eq.s32.totalorder %s21, 1
      %p90 = por %p88, %p89
      %p91 = scmp.ne.s32.totalorder %s83, %s86
      %p92 = scmp.eq.s32.totalorder %s21, 0
      %p93 = por %p91, %p92
      %p94 = scmp.ne.s32.totalorder %s83, %s86
      %p95 = scmp.eq.s32.totalorder %s26, 1
      %p96 = por %p94, %p95
      %p97 = scmp.ne.s32.totalorder %s86, %s87
      %p98 = scmp.eq.s32.totalorder %s26, 0
      %p99 = por %p97, %p98
      %p100 = scmp.ne.s32.totalorder %s86, %s87
      %p101 = scmp.eq.s32.totalorder %s27, 1
      %p102 = por %p100, %p101
      %p104 = scmp.ne.s32.totalorder %s87, %s103
      %p105 = scmp.eq.s32.totalorder %s27, 0
      %p106 = por %p104, %p105
      %s108 = sadd.s32 %s107, 1
      %p111 = scmp.eq.s32.totalorder %s21, 1
      %p112 = scmp.ne.s32.totalorder %s107, %s109
      %p113 = scmp.eq.s32.totalorder %s21, 0
      %p114 = por %p112, %p113
      %p115 = scmp.ne.s32.totalorder %s107, %s109
      %p116 = scmp.eq.s32.totalorder %s26, 1
      %p117 = por %p115, %p116
      %p118 = scmp.ne.s32.totalorder %s109, %s110
      %p119 = scmp.eq.s32.totalorder %s26, 0
      %p120 = por %p118, %p119
      %p121 = scmp.ne.s32.totalorder %s109, %s110
      %p122 = scmp.eq.s32.totalorder %s27, 1
      %p123 = por %p121, %p122
      %p125 = scmp.ne.s32.totalorder %s110, %s124
      %p126 = scmp.eq.s32.totalorder %s27, 0
      %p127 = por %p125, %p126
      %s129 = sadd.s32 %s128, 1
      %p132 = scmp.eq.s32.totalorder %s21, 1
      %p133 = scmp.ne.s32.totalorder %s128, %s130
      %p134 = scmp.eq.s32.totalorder %s21, 0
      %p135 = por %p133, %p134
      %p136 = scmp.ne.s32.totalorder %s128, %s130
      %p137 = scmp.eq.s32.totalorder %s26, 1
      %p138 = por %p136, %p137
      %p139 = scmp.ne.s32.totalorder %s130, %s131
      %p140 = scmp.eq.s32.totalorder %s26, 0
      %p141 = por %p139, %p140
      %p142 = scmp.ne.s32.totalorder %s130, %s131
      %p143 = scmp.eq.s32.totalorder %s27, 1
      %p144 = por %p142, %p143
      %p146 = scmp.ne.s32.totalorder %s131, %s145
      %p147 = scmp.eq.s32.totalorder %s27, 0
      %p148 = por %p146, %p147
      %s149 = ssub.s32 %s21, %s28
      %p150 = scmp.eq.s32.totalorder %s149, 0
      %s152 = sadd.s32 %s151, 1
      %s153 = scalar_select %p150, %s151, %s152
      %p156 = pneg %p150
      %p157 = scmp.eq.s32.totalorder %s21, 1
      %p158 = por %p156, %p157
      %p159 = scmp.ne.s32.totalorder %s151, %s154
      %p160 = scmp.eq.s32.totalorder %s21, 0
      %p161 = por %p159, %p160
      %p162 = scmp.ne.s32.totalorder %s151, %s154
      %p163 = scmp.eq.s32.totalorder %s26, 1
      %p164 = por %p162, %p163
      %p165 = scmp.ne.s32.totalorder %s154, %s155
      %p166 = scmp.eq.s32.totalorder %s26, 0
      %p167 = por %p165, %p166
      %p168 = scmp.ne.s32.totalorder %s154, %s155
      %p169 = scmp.eq.s32.totalorder %s27, 1
      %p170 = por %p168, %p169
      %p172 = scmp.ne.s32.totalorder %s155, %s171
      %p173 = scmp.eq.s32.totalorder %s27, 0
      %p174 = por %p172, %p173
      %p175 = scmp.le.s32.totalorder 1, %s21
      %p176 = scmp.lt.s32.totalorder %s21, 3
      %p177 = pnand %p175, %p176
      %p178 = pneg %p177
      // Predicated region
      $region9: #{tpu_custom_call.1} parent=5 // pred_check
        _
      $region10: #{tpu_custom_call.1} parent=5 // pred_check_branch
        %180 = sbr.rel (%p177) target = $region12
      $region11: #{tpu_custom_call.1} parent=5 // pred_region
        %s181 = ssub.s32 %s21, 1
        // Predicated region
        $region13: #{tpu_custom_call.1} parent=11 // pred_check
          %p182 = pneg %p120
        $region14: #{tpu_custom_call.1} parent=11 // pred_check_branch
          %184 = sbr.rel (%p182) target = $region16
        $region15: #{tpu_custom_call.1} parent=11 // pred_region
          %s186 = ssub.s32 2048, 2048
          %187 = vsyncadd [#allocation9], %s186
          %s188 = sshll.u32 [#allocation8], 4
          %s189 = int_to_ptr.vmem [resolvable:$true] %s188
          %194 = dma.hbm_to_vmem [thread:$0]  %s3, 2048, %s189, [#allocation9], 128, 128, 8
        $region16: #{tpu_custom_call.1} parent=11 // pred_fallthru
          _
        // Predicated region
        $region17: #{tpu_custom_call.1} parent=11 // pred_check
          %p195 = pneg %p141
        $region18: #{tpu_custom_call.1} parent=11 // pred_check_branch
          %197 = sbr.rel (%p195) target = $region20
        $region19: #{tpu_custom_call.1} parent=11 // pred_region
          _
        $region20: #{tpu_custom_call.1} parent=11 // pred_fallthru
          _
      $region12: #{tpu_custom_call.1} parent=5 // pred_fallthru
        _
      %p198 = scmp.lt.s32.totalorder %s21, 2
      // Predicated region
      $region21: #{tpu_custom_call.1} parent=5 // pred_check
        %p199 = pneg %p198
      $region22: #{tpu_custom_call.1} parent=5 // pred_check_branch
        %201 = sbr.rel (%p199) target = $region24
      $region23: #{tpu_custom_call.1} parent=5 // pred_region
        // Predicated region
        $region25: #{tpu_custom_call.1} parent=23 // pred_check
          %p202 = pneg %p41
        $region26: #{tpu_custom_call.1} parent=23 // pred_check_branch
          %204 = sbr.rel (%p202) target = $region28
        $region27: #{tpu_custom_call.1} parent=23 // pred_region
          %s205 = sand.u32 %s31, 1
          %s206 = scalar_lea.sflag [#allocation3], %s205
          %s207 = sand.u32 %s31, 1
          %s208 = smul.addr %s207, 8
          %s209 = scalar_lea.vmem [#allocation2], %s208
          %s211 = ssub.s32 128, 128
          %212 = vsyncadd %s206, %s211
          %s213 = smul.addr %s21, 128
          %s214 = scalar_lea.hbm %s0, %s213
          %s216 = sshll.u32 %s209, 4
          %s217 = int_to_ptr.vmem [resolvable:$true] %s216
          %219 = dma.hbm_to_vmem [thread:$0]  %s214, 128, %s217, %s206
        $region28: #{tpu_custom_call.1} parent=23 // pred_fallthru
          _
        // Predicated region
        $region29: #{tpu_custom_call.1} parent=23 // pred_check
          %p220 = pneg %p67
        $region30: #{tpu_custom_call.1} parent=23 // pred_check_branch
          %222 = sbr.rel (%p220) target = $region32
        $region31: #{tpu_custom_call.1} parent=23 // pred_region
          %s223 = sand.u32 %s21, 1
          %s224 = scalar_lea.sflag [#allocation6], %s223
          %s225 = sand.u32 %s57, 1
          %s226 = smul.addr %s225, 8
          %s227 = scalar_lea.vmem [#allocation5], %s226
          %s229 = ssub.s32 128, 128
          %230 = vsyncadd %s224, %s229
          %s231 = smul.addr %s21, 128
          %s232 = scalar_lea.hbm %s1, %s231
          %s234 = sshll.u32 %s227, 4
          %s235 = int_to_ptr.vmem [resolvable:$true] %s234
          %237 = dma.hbm_to_vmem [thread:$0]  %s232, 128, %s235, %s224
        $region32: #{tpu_custom_call.1} parent=23 // pred_fallthru
          _
        // Predicated region
        $region33: #{tpu_custom_call.1} parent=23 // pred_check
          %p238 = pneg %p93
        $region34: #{tpu_custom_call.1} parent=23 // pred_check_branch
          %240 = sbr.rel (%p238) target = $region36
        $region35: #{tpu_custom_call.1} parent=23 // pred_region
          %s241 = sand.u32 %s21, 1
          %s242 = scalar_lea.sflag [#allocation6], %s241
          %s243 = sand.u32 %s83, 1
          %s244 = smul.addr %s243, 8
          %s245 = scalar_lea.vmem [#allocation7], %s244
          %s247 = ssub.s32 128, 128
          %248 = vsyncadd %s242, %s247
          %s249 = smul.addr %s21, 128
          %s250 = scalar_lea.hbm %s2, %s249
          %s252 = sshll.u32 %s245, 4
          %s253 = int_to_ptr.vmem [resolvable:$true] %s252
          %255 = dma.hbm_to_vmem [thread:$0]  %s250, 128, %s253, %s242
        $region36: #{tpu_custom_call.1} parent=23 // pred_fallthru
          _
      $region24: #{tpu_custom_call.1} parent=5 // pred_fallthru
        _
      %p256 = scmp.le.s32.totalorder 1, %s21
      %p257 = scmp.lt.s32.totalorder %s21, 3
      %p258 = pnand %p256, %p257
      %p259 = pneg %p258
      // Predicated region
      $region37: #{tpu_custom_call.1} parent=5 // pred_check
        _
      $region38: #{tpu_custom_call.1} parent=5 // pred_check_branch
        %261 = sbr.rel (%p258) target = $region40
      $region39: #{tpu_custom_call.1} parent=5 // pred_region
        %s262 = ssub.s32 %s21, 1
        %s263 = sand.u32 %s34, 1
        %s264 = scalar_lea.sflag [#allocation3], %s263
        %s265 = sand.u32 %s34, 1
        %s266 = smul.addr %s265, 8
        %s267 = scalar_lea.vmem [#allocation2], %s266
        // Predicated region
        $region41: #{tpu_custom_call.1} parent=39 // pred_check
          %p268 = pneg %p47
        $region42: #{tpu_custom_call.1} parent=39 // pred_check_branch
          %270 = sbr.rel (%p268) target = $region44
        $region43: #{tpu_custom_call.1} parent=39 // pred_region
          %271 = dma.done %s264, 128
        $region44: #{tpu_custom_call.1} parent=39 // pred_fallthru
          _
        %s272 = sand.u32 %s26, 1
        %s273 = scalar_lea.sflag [#allocation6], %s272
        %s274 = sand.u32 %s60, 1
        %s275 = smul.addr %s274, 8
        %s276 = scalar_lea.vmem [#allocation5], %s275
        // Predicated region
        $region45: #{tpu_custom_call.1} parent=39 // pred_check
          %p277 = pneg %p73
        $region46: #{tpu_custom_call.1} parent=39 // pred_check_branch
          %279 = sbr.rel (%p277) target = $region48
        $region47: #{tpu_custom_call.1} parent=39 // pred_region
          %280 = dma.done %s273, 128
        $region48: #{tpu_custom_call.1} parent=39 // pred_fallthru
          _
        %s281 = sand.u32 %s26, 1
        %s282 = scalar_lea.sflag [#allocation6], %s281
        %s283 = sand.u32 %s86, 1
        %s284 = smul.addr %s283, 8
        %s285 = scalar_lea.vmem [#allocation7], %s284
        // Predicated region
        $region49: #{tpu_custom_call.1} parent=39 // pred_check
          %p286 = pneg %p99
        $region50: #{tpu_custom_call.1} parent=39 // pred_check_branch
          %288 = sbr.rel (%p286) target = $region52
        $region51: #{tpu_custom_call.1} parent=39 // pred_region
          %289 = dma.done %s282, 128
        $region52: #{tpu_custom_call.1} parent=39 // pred_fallthru
          _
        // Predicated region
        $region53: #{tpu_custom_call.1} parent=39 // pred_check
          %p290 = pneg %p120
        $region54: #{tpu_custom_call.1} parent=39 // pred_check_branch
          %292 = sbr.rel (%p290) target = $region56
        $region55: #{tpu_custom_call.1} parent=39 // pred_region
          %293 = dma.done [#allocation9], 2048
        $region56: #{tpu_custom_call.1} parent=39 // pred_fallthru
          _
        %s294 = sand.u32 %s34, 1
        %s295 = scalar_lea.sflag [#allocation3], %s294
        %s296 = sand.u32 %s34, 1
        %s297 = smul.addr %s296, 8
        %s298 = scalar_lea.vmem [#allocation2], %s297
        %p299 = pneg %p47
        %p300 = pneg %p44
        %s301 = sand.u32 %s26, 1
        %s302 = scalar_lea.sflag [#allocation6], %s301
        %s303 = sand.u32 %s60, 1
        %s304 = smul.addr %s303, 8
        %s305 = scalar_lea.vmem [#allocation5], %s304
        %p306 = pneg %p73
        %p307 = pneg %p70
        %s308 = sand.u32 %s26, 1
        %s309 = scalar_lea.sflag [#allocation6], %s308
        %s310 = sand.u32 %s86, 1
        %s311 = smul.addr %s310, 8
        %s312 = scalar_lea.vmem [#allocation7], %s311
        %p313 = pneg %p99
        %p314 = pneg %p96
        %p315 = pneg %p120
        %p316 = pneg %p117
        %p317 = pneg %p141
        %p318 = pneg %p138
        %p319 = pneg %p167
        %p320 = pneg %p164
        %s321 = sand.u32 %s154, 1
        %s322 = scalar_lea.sflag [#allocation4], %s321
        %s323 = sand.u32 %s154, 1
        %s324 = smul.addr %s323, 8
        %s325 = scalar_lea.vmem [#allocation10], %s324
        %v326 = vld [vmem:[%s267] sm:$0xff]
        %v327 = vld [vmem:[%s276] sm:$0xff]
        %v328 = vld [vmem:[%s285] sm:$0xff]
        %v329 = vld [vmem:[%s4] sm:$0xf]
        %v330 = vld [vmem:[#allocation8] sm:$0xff]
        %v331 = vld [vmem:[#allocation8 + $0x8] sm:$0xff]
        %v332 = vld [vmem:[#allocation8 + $0x10] sm:$0xff]
        %v333 = vld [vmem:[#allocation8 + $0x18] sm:$0xff]
        %v334 = vlaneseq
        %v335 = vshrl.u32 %v334, 7
        %v336 = vsub.s32 0, %v335
        %v337 = vrot.slane %v329, %v336
        %vm338 = vcmask 261120
        %v340 = vsel %vm338, %v326, 0
        %342 = vmatprep.subr.mxu0 0.0
        %343 = vmatpush1.msra.mxu0 %v330
        %344 = vmatprep.subr.mxu0 0.0
        %345 = vmatpush1.msra.mxu0 %v331
        %346 = vmatprep.subr.mxu0 0.0
        %347 = vmatpush1.msra.mxu0 %v332
        %348 = vmatprep.subr.mxu0 0.0
        %349 = vmatpush1.msra.mxu0 %v333
        %350 = vmatprep.subr.mxu0 0.0
        %351 = vmatpush1.msra.mxu0 0.0
        %352 = vmatprep.subr.mxu0 0.0
        %353 = vmatpush1.msra.mxu0 0.0
        %354 = vmatprep.subr.mxu0 0.0
        %355 = vmatpush1.msra.mxu0 0.0
        %356 = vmatprep.subr.mxu0 0.0
        %357 = vmatpush1.msra.mxu0 0.0
        %358 = vmatprep.subr.mxu0 0.0
        %359 = vmatpush1.msra.mxu0 0.0
        %360 = vmatprep.subr.mxu0 0.0
        %361 = vmatpush1.msra.mxu0 0.0
        %362 = vmatprep.subr.mxu0 0.0
        %363 = vmatpush1.msra.mxu0 0.0
        %364 = vmatprep.subr.mxu0 0.0
        %365 = vmatpush1.msra.mxu0 0.0
        %366 = vmatprep.subr.mxu0 0.0
        %367 = vmatpush1.msra.mxu0 0.0
        %368 = vmatprep.subr.mxu0 0.0
        %369 = vmatpush1.msra.mxu0 0.0
        %370 = vmatprep.subr.mxu0 0.0
        %371 = vmatpush1.msra.mxu0 0.0
        %372 = vmatprep.subr.mxu0 0.0
        %373 = vmatpush1.msra.mxu0 0.0
        %374 = vmatprep.subr.mxu0 0.0
        %375 = vmatpush1.msra.mxu0 0.0
        %376 = vmatprep.subr.mxu0 0.0
        %377 = vmatpush1.msra.mxu0 0.0
        %378 = vmatprep.subr.mxu0 0.0
        %379 = vmatpush1.msra.mxu0 0.0
        %380 = vmatprep.subr.mxu0 0.0
        %381 = vmatpush1.msra.mxu0 0.0
        %382 = vmatprep.subr.mxu0 0.0
        %383 = vmatpush1.msra.mxu0 0.0
        %384 = vmatprep.subr.mxu0 0.0
        %385 = vmatpush1.msra.mxu0 0.0
        %386 = vmatprep.subr.mxu0 0.0
        %387 = vmatpush1.msra.mxu0 0.0
        %388 = vmatprep.subr.mxu0 0.0
        %389 = vmatpush1.msra.mxu0 0.0
        %390 = vmatprep.subr.mxu0 0.0
        %391 = vmatpush1.msra.mxu0 0.0
        %392 = vmatprep.subr.mxu0 0.0
        %393 = vmatpush1.msra.mxu0 0.0
        %394 = vmatprep.subr.mxu0 0.0
        %395 = vmatpush1.msra.mxu0 0.0
        %396 = vmatprep.subr.mxu0 0.0
        %397 = vmatpush1.msra.mxu0 0.0
        %398 = vmatprep.subr.mxu0 0.0
        %399 = vmatpush1.msra.mxu0 0.0
        %400 = vmatprep.subr.mxu0 0.0
        %401 = vmatpush1.msra.mxu0 0.0
        %402 = vmatprep.subr.mxu0 0.0
        %403 = vmatpush1.msra.mxu0 0.0
        %404 = vmatprep.subr.mxu0 0.0
        %405 = vmatpush1.msra.mxu0 0.0
        %406 = vmatprep.mubr.f32.mxu0 0.0
        %407 = vmatmul.mubr.f32.gmra.mrb[0].mxu0 %v340
        %v408 = vpop.f32.mrb[0].mxu0
        %v409 = vadd.f32 %v337, %v408
        %v410 = vpop.f32.mrb[0].mxu0
        %411 = vdwg.mxu0
        %s412 = scalar_lea.vmem [#allocation8], 32
        %v413 = vld [vmem:[%s412] sm:$0xff]
        %v414 = vld [vmem:[%s412 + $0x8] sm:$0xff]
        %v415 = vld [vmem:[%s412 + $0x10] sm:$0xff]
        %v416 = vld [vmem:[%s412 + $0x18] sm:$0xff]
        %v417 = vlaneseq
        %v418 = vshrl.u32 %v417, 7
        %v419 = vsub.s32 1, %v418
        %v420 = vrot.slane %v329, %v419
        %v422 = vsel %vm338, %v327, 0
        %424 = vmatprep.subr.mxu0 0.0
        %425 = vmatpush1.msra.mxu0 %v413
        %426 = vmatprep.subr.mxu0 0.0
        %427 = vmatpush1.msra.mxu0 %v414
        %428 = vmatprep.subr.mxu0 0.0
        %429 = vmatpush1.msra.mxu0 %v415
        %430 = vmatprep.subr.mxu0 0.0
        %431 = vmatpush1.msra.mxu0 %v416
        %432 = vmatprep.subr.mxu0 0.0
        %433 = vmatpush1.msra.mxu0 0.0
        %434 = vmatprep.subr.mxu0 0.0
        %435 = vmatpush1.msra.mxu0 0.0
        %436 = vmatprep.subr.mxu0 0.0
        %437 = vmatpush1.msra.mxu0 0.0
        %438 = vmatprep.subr.mxu0 0.0
        %439 = vmatpush1.msra.mxu0 0.0
        %440 = vmatprep.subr.mxu0 0.0
        %441 = vmatpush1.msra.mxu0 0.0
        %442 = vmatprep.subr.mxu0 0.0
        %443 = vmatpush1.msra.mxu0 0.0
        %444 = vmatprep.subr.mxu0 0.0
        %445 = vmatpush1.msra.mxu0 0.0
        %446 = vmatprep.subr.mxu0 0.0
        %447 = vmatpush1.msra.mxu0 0.0
        %448 = vmatprep.subr.mxu0 0.0
        %449 = vmatpush1.msra.mxu0 0.0
        %450 = vmatprep.subr.mxu0 0.0
        %451 = vmatpush1.msra.mxu0 0.0
        %452 = vmatprep.subr.mxu0 0.0
        %453 = vmatpush1.msra.mxu0 0.0
        %454 = vmatprep.subr.mxu0 0.0
        %455 = vmatpush1.msra.mxu0 0.0
        %456 = vmatprep.subr.mxu0 0.0
        %457 = vmatpush1.msra.mxu0 0.0
        %458 = vmatprep.subr.mxu0 0.0
        %459 = vmatpush1.msra.mxu0 0.0
        %460 = vmatprep.subr.mxu0 0.0
        %461 = vmatpush1.msra.mxu0 0.0
        %462 = vmatprep.subr.mxu0 0.0
        %463 = vmatpush1.msra.mxu0 0.0
        %464 = vmatprep.subr.mxu0 0.0
        %465 = vmatpush1.msra.mxu0 0.0
        %466 = vmatprep.subr.mxu0 0.0
        %467 = vmatpush1.msra.mxu0 0.0
        %468 = vmatprep.subr.mxu0 0.0
        %469 = vmatpush1.msra.mxu0 0.0
        %470 = vmatprep.subr.mxu0 0.0
        %471 = vmatpush1.msra.mxu0 0.0
        %472 = vmatprep.subr.mxu0 0.0
        %473 = vmatpush1.msra.mxu0 0.0
        %474 = vmatprep.subr.mxu0 0.0
        %475 = vmatpush1.msra.mxu0 0.0
        %476 = vmatprep.subr.mxu0 0.0
        %477 = vmatpush1.msra.mxu0 0.0
        %478 = vmatprep.subr.mxu0 0.0
        %479 = vmatpush1.msra.mxu0 0.0
        %480 = vmatprep.subr.mxu0 0.0
        %481 = vmatpush1.msra.mxu0 0.0
        %482 = vmatprep.subr.mxu0 0.0
        %483 = vmatpush1.msra.mxu0 0.0
        %484 = vmatprep.subr.mxu0 0.0
        %485 = vmatpush1.msra.mxu0 0.0
        %486 = vmatprep.subr.mxu0 0.0
        %487 = vmatpush1.msra.mxu0 0.0
        %488 = vmatprep.mubr.f32.mxu0 0.0
        %489 = vmatmul.mubr.f32.gmra.mrb[0].mxu0 %v422
        %v490 = vpop.f32.mrb[0].mxu0
        %v491 = vadd.f32 %v420, %v490
        %v492 = vpop.f32.mrb[0].mxu0
        %493 = vdwg.mxu0
        %s494 = scalar_lea.vmem [#allocation8], 64
        %v495 = vld [vmem:[%s494] sm:$0xff]
        %v496 = vld [vmem:[%s494 + $0x8] sm:$0xff]
        %v497 = vld [vmem:[%s494 + $0x10] sm:$0xff]
        %v498 = vld [vmem:[%s494 + $0x18] sm:$0xff]
        %v499 = vlaneseq
        %v500 = vshrl.u32 %v499, 7
        %v501 = vsub.s32 2, %v500
        %v502 = vrot.slane %v329, %v501
        %v504 = vsel %vm338, %v328, 0
        %506 = vmatprep.subr.mxu0 0.0
        %507 = vmatpush1.msra.mxu0 %v495
        %508 = vmatprep.subr.mxu0 0.0
        %509 = vmatpush1.msra.mxu0 %v496
        %510 = vmatprep.subr.mxu0 0.0
        %511 = vmatpush1.msra.mxu0 %v497
        %512 = vmatprep.subr.mxu0 0.0
        %513 = vmatpush1.msra.mxu0 %v498
        %514 = vmatprep.subr.mxu0 0.0
        %515 = vmatpush1.msra.mxu0 0.0
        %516 = vmatprep.subr.mxu0 0.0
        %517 = vmatpush1.msra.mxu0 0.0
        %518 = vmatprep.subr.mxu0 0.0
        %519 = vmatpush1.msra.mxu0 0.0
        %520 = vmatprep.subr.mxu0 0.0
        %521 = vmatpush1.msra.mxu0 0.0
        %522 = vmatprep.subr.mxu0 0.0
        %523 = vmatpush1.msra.mxu0 0.0
        %524 = vmatprep.subr.mxu0 0.0
        %525 = vmatpush1.msra.mxu0 0.0
        %526 = vmatprep.subr.mxu0 0.0
        %527 = vmatpush1.msra.mxu0 0.0
        %528 = vmatprep.subr.mxu0 0.0
        %529 = vmatpush1.msra.mxu0 0.0
        %530 = vmatprep.subr.mxu0 0.0
        %531 = vmatpush1.msra.mxu0 0.0
        %532 = vmatprep.subr.mxu0 0.0
        %533 = vmatpush1.msra.mxu0 0.0
        %534 = vmatprep.subr.mxu0 0.0
        %535 = vmatpush1.msra.mxu0 0.0
        %536 = vmatprep.subr.mxu0 0.0
        %537 = vmatpush1.msra.mxu0 0.0
        %538 = vmatprep.subr.mxu0 0.0
        %539 = vmatpush1.msra.mxu0 0.0
        %540 = vmatprep.subr.mxu0 0.0
        %541 = vmatpush1.msra.mxu0 0.0
        %542 = vmatprep.subr.mxu0 0.0
        %543 = vmatpush1.msra.mxu0 0.0
        %544 = vmatprep.subr.mxu0 0.0
        %545 = vmatpush1.msra.mxu0 0.0
        %546 = vmatprep.subr.mxu0 0.0
        %547 = vmatpush1.msra.mxu0 0.0
        %548 = vmatprep.subr.mxu0 0.0
        %549 = vmatpush1.msra.mxu0 0.0
        %550 = vmatprep.subr.mxu0 0.0
        %551 = vmatpush1.msra.mxu0 0.0
        %552 = vmatprep.subr.mxu0 0.0
        %553 = vmatpush1.msra.mxu0 0.0
        %554 = vmatprep.subr.mxu0 0.0
        %555 = vmatpush1.msra.mxu0 0.0
        %556 = vmatprep.subr.mxu0 0.0
        %557 = vmatpush1.msra.mxu0 0.0
        %558 = vmatprep.subr.mxu0 0.0
        %559 = vmatpush1.msra.mxu0 0.0
        %560 = vmatprep.subr.mxu0 0.0
        %561 = vmatpush1.msra.mxu0 0.0
        %562 = vmatprep.subr.mxu0 0.0
        %563 = vmatpush1.msra.mxu0 0.0
        %564 = vmatprep.subr.mxu0 0.0
        %565 = vmatpush1.msra.mxu0 0.0
        %566 = vmatprep.subr.mxu0 0.0
        %567 = vmatpush1.msra.mxu0 0.0
        %568 = vmatprep.subr.mxu0 0.0
        %569 = vmatpush1.msra.mxu0 0.0
        %570 = vmatprep.mubr.f32.mxu0 0.0
        %571 = vmatmul.mubr.f32.gmra.mrb[0].mxu0 %v504
        %v572 = vpop.f32.mrb[0].mxu0
        %v573 = vadd.f32 %v502, %v572
        %v574 = vpop.f32.mrb[0].mxu0
        %575 = vdwg.mxu0
        %s576 = scalar_lea.vmem [#allocation8], 96
        %v577 = vld [vmem:[%s576] sm:$0xff]
        %v578 = vld [vmem:[%s576 + $0x8] sm:$0xff]
        %v579 = vld [vmem:[%s576 + $0x10] sm:$0xff]
        %v580 = vld [vmem:[%s576 + $0x18] sm:$0xff]
        %vm581 = vcmask 64512
        %v583 = vsel %vm581, %v409, 0
        %v586 = vsel %vm581, %v491, 0
        %588 = vmatprep.subr.mxu0 0.0
        %589 = vmatpush1.xpose.msra.mxu0 %v586
        %590 = vmatprep.subr.mxu0 0.0
        %591 = vmatpush1.xpose.msra.mxu0 0.0
        %592 = vmatprep.subr.mxu0 0.0
        %593 = vmatpush1.xpose.msra.mxu0 0.0
        %594 = vmatprep.subr.mxu0 0.0
        %595 = vmatpush1.xpose.msra.mxu0 0.0
        %596 = vmatprep.subr.mxu0 0.0
        %597 = vmatpush1.xpose.msra.mxu0 0.0
        %598 = vmatprep.subr.mxu0 0.0
        %599 = vmatpush1.xpose.msra.mxu0 0.0
        %600 = vmatprep.subr.mxu0 0.0
        %601 = vmatpush1.xpose.msra.mxu0 0.0
        %602 = vmatprep.subr.mxu0 0.0
        %603 = vmatpush1.xpose.msra.mxu0 0.0
        %604 = vmatprep.subr.mxu0 0.0
        %605 = vmatpush1.xpose.msra.mxu0 0.0
        %606 = vmatprep.subr.mxu0 0.0
        %607 = vmatpush1.xpose.msra.mxu0 0.0
        %608 = vmatprep.subr.mxu0 0.0
        %609 = vmatpush1.xpose.msra.mxu0 0.0
        %610 = vmatprep.subr.mxu0 0.0
        %611 = vmatpush1.xpose.msra.mxu0 0.0
        %612 = vmatprep.subr.mxu0 0.0
        %613 = vmatpush1.xpose.msra.mxu0 0.0
        %614 = vmatprep.subr.mxu0 0.0
        %615 = vmatpush1.xpose.msra.mxu0 0.0
        %616 = vmatprep.subr.mxu0 0.0
        %617 = vmatpush1.xpose.msra.mxu0 0.0
        %618 = vmatprep.subr.mxu0 0.0
        %619 = vmatpush1.xpose.msra.mxu0 0.0
        %620 = vmatprep.subr.mxu0 0.0
        %621 = vmatpush1.xpose.msra.mxu0 0.0
        %622 = vmatprep.subr.mxu0 0.0
        %623 = vmatpush1.xpose.msra.mxu0 0.0
        %624 = vmatprep.subr.mxu0 0.0
        %625 = vmatpush1.xpose.msra.mxu0 0.0
        %626 = vmatprep.subr.mxu0 0.0
        %627 = vmatpush1.xpose.msra.mxu0 0.0
        %628 = vmatprep.subr.mxu0 0.0
        %629 = vmatpush1.xpose.msra.mxu0 0.0
        %630 = vmatprep.subr.mxu0 0.0
        %631 = vmatpush1.xpose.msra.mxu0 0.0
        %632 = vmatprep.subr.mxu0 0.0
        %633 = vmatpush1.xpose.msra.mxu0 0.0
        %634 = vmatprep.subr.mxu0 0.0
        %635 = vmatpush1.xpose.msra.mxu0 0.0
        %636 = vmatprep.subr.mxu0 0.0
        %637 = vmatpush1.xpose.msra.mxu0 0.0
        %638 = vmatprep.subr.mxu0 0.0
        %639 = vmatpush1.xpose.msra.mxu0 0.0
        %640 = vmatprep.subr.mxu0 0.0
        %641 = vmatpush1.xpose.msra.mxu0 0.0
        %642 = vmatprep.subr.mxu0 0.0
        %643 = vmatpush1.xpose.msra.mxu0 0.0
        %644 = vmatprep.subr.mxu0 0.0
        %645 = vmatpush1.xpose.msra.mxu0 0.0
        %646 = vmatprep.subr.mxu0 0.0
        %647 = vmatpush1.xpose.msra.mxu0 0.0
        %648 = vmatprep.subr.mxu0 0.0
        %649 = vmatpush1.xpose.msra.mxu0 0.0
        %650 = vmatprep.subr.mxu0 0.0
        %651 = vmatpush1.xpose.msra.mxu0 0.0
        %652 = vmatprep.mubr.f32.mxu0 0.0
        %653 = vmatmul.mubr.f32.gmra.mrb[0].mxu0 %v583
        %v654 = vpop.f32.mrb[0].mxu0
        %v655 = vadd.f32 0.0, %v654
        %v656 = vpop.f32.mrb[0].mxu0
        %657 = vdwg.mxu0
        %v658 = vsel %vm581, %v655, -inf
        %659 = vmax.xlane.f32.xlu0 %v658
        %v660 = vpop.xlane.xlu0 %659
        %v661 = vsub.f32 %v655, %v660
        %v662 = vmul.f32 %v661, 1.442695
        %v663 = vpow.pop %v662
        %v664 = vsel %vm581, %v663, 0.0
        %665 = vadd.xlane.f32.xlu0 %v664
        %v666 = vpop.xlane.xlu0 %665
        %v667 = vrcp.pop %v666
        %v668 = vmul.f32 %v663, %v667
        %v670 = vsel %vm581, %v668, 0
        %672 = vmatprep.subr.mxu0 0.0
        %673 = vmatpush1.msra.mxu0 %v573
        %674 = vmatprep.subr.mxu0 0.0
        %675 = vmatpush1.msra.mxu0 0.0
        %676 = vmatprep.subr.mxu0 0.0
        %677 = vmatpush1.msra.mxu0 0.0
        %678 = vmatprep.subr.mxu0 0.0
        %679 = vmatpush1.msra.mxu0 0.0
        %680 = vmatprep.subr.mxu0 0.0
        %681 = vmatpush1.msra.mxu0 0.0
        %682 = vmatprep.subr.mxu0 0.0
        %683 = vmatpush1.msra.mxu0 0.0
        %684 = vmatprep.subr.mxu0 0.0
        %685 = vmatpush1.msra.mxu0 0.0
        %686 = vmatprep.subr.mxu0 0.0
        %687 = vmatpush1.msra.mxu0 0.0
        %688 = vmatprep.subr.mxu0 0.0
        %689 = vmatpush1.msra.mxu0 0.0
        %690 = vmatprep.subr.mxu0 0.0
        %691 = vmatpush1.msra.mxu0 0.0
        %692 = vmatprep.subr.mxu0 0.0
        %693 = vmatpush1.msra.mxu0 0.0
        %694 = vmatprep.subr.mxu0 0.0
        %695 = vmatpush1.msra.mxu0 0.0
        %696 = vmatprep.subr.mxu0 0.0
        %697 = vmatpush1.msra.mxu0 0.0
        %698 = vmatprep.subr.mxu0 0.0
        %699 = vmatpush1.msra.mxu0 0.0
        %700 = vmatprep.subr.mxu0 0.0
        %701 = vmatpush1.msra.mxu0 0.0
        %702 = vmatprep.subr.mxu0 0.0
        %703 = vmatpush1.msra.mxu0 0.0
        %704 = vmatprep.subr.mxu0 0.0
        %705 = vmatpush1.msra.mxu0 0.0
        %706 = vmatprep.subr.mxu0 0.0
        %707 = vmatpush1.msra.mxu0 0.0
        %708 = vmatprep.subr.mxu0 0.0
        %709 = vmatpush1.msra.mxu0 0.0
        %710 = vmatprep.subr.mxu0 0.0
        %711 = vmatpush1.msra.mxu0 0.0
        %712 = vmatprep.subr.mxu0 0.0
        %713 = vmatpush1.msra.mxu0 0.0
        %714 = vmatprep.subr.mxu0 0.0
        %715 = vmatpush1.msra.mxu0 0.0
        %716 = vmatprep.subr.mxu0 0.0
        %717 = vmatpush1.msra.mxu0 0.0
        %718 = vmatprep.subr.mxu0 0.0
        %719 = vmatpush1.msra.mxu0 0.0
        %720 = vmatprep.subr.mxu0 0.0
        %721 = vmatpush1.msra.mxu0 0.0
        %722 = vmatprep.subr.mxu0 0.0
        %723 = vmatpush1.msra.mxu0 0.0
        %724 = vmatprep.subr.mxu0 0.0
        %725 = vmatpush1.msra.mxu0 0.0
        %726 = vmatprep.subr.mxu0 0.0
        %727 = vmatpush1.msra.mxu0 0.0
        %728 = vmatprep.subr.mxu0 0.0
        %729 = vmatpush1.msra.mxu0 0.0
        %730 = vmatprep.subr.mxu0 0.0
        %731 = vmatpush1.msra.mxu0 0.0
        %732 = vmatprep.subr.mxu0 0.0
        %733 = vmatpush1.msra.mxu0 0.0
        %734 = vmatprep.subr.mxu0 0.0
        %735 = vmatpush1.msra.mxu0 0.0
        %736 = vmatprep.mubr.f32.mxu0 0.0
        %737 = vmatmul.mubr.f32.gmra.mrb[0].mxu0 %v670
        %v738 = vpop.f32.mrb[0].mxu0
        %v739 = vadd.f32 0.0, %v738
        %v740 = vpop.f32.mrb[0].mxu0
        %741 = vdwg.mxu0
        %742 = vrot.lane.b32.xlu0 %v409, 120
        %v743 = vpop.permute.xlu0 %742
        %744 = vrot.lane.b32.xlu0 %v491, 120
        %v745 = vpop.permute.xlu0 %744
        %v746 = vsel %vm581, %v743, 0
        %v748 = vsel %vm581, %v745, 0
        %750 = vmatprep.subr.mxu0 0.0
        %751 = vmatpush1.xpose.msra.mxu0 %v748
        %752 = vmatprep.subr.mxu0 0.0
        %753 = vmatpush1.xpose.msra.mxu0 0.0
        %754 = vmatprep.subr.mxu0 0.0
        %755 = vmatpush1.xpose.msra.mxu0 0.0
        %756 = vmatprep.subr.mxu0 0.0
        %757 = vmatpush1.xpose.msra.mxu0 0.0
        %758 = vmatprep.subr.mxu0 0.0
        %759 = vmatpush1.xpose.msra.mxu0 0.0
        %760 = vmatprep.subr.mxu0 0.0
        %761 = vmatpush1.xpose.msra.mxu0 0.0
        %762 = vmatprep.subr.mxu0 0.0
        %763 = vmatpush1.xpose.msra.mxu0 0.0
        %764 = vmatprep.subr.mxu0 0.0
        %765 = vmatpush1.xpose.msra.mxu0 0.0
        %766 = vmatprep.subr.mxu0 0.0
        %767 = vmatpush1.xpose.msra.mxu0 0.0
        %768 = vmatprep.subr.mxu0 0.0
        %769 = vmatpush1.xpose.msra.mxu0 0.0
        %770 = vmatprep.subr.mxu0 0.0
        %771 = vmatpush1.xpose.msra.mxu0 0.0
        %772 = vmatprep.subr.mxu0 0.0
        %773 = vmatpush1.xpose.msra.mxu0 0.0
        %774 = vmatprep.subr.mxu0 0.0
        %775 = vmatpush1.xpose.msra.mxu0 0.0
        %776 = vmatprep.subr.mxu0 0.0
        %777 = vmatpush1.xpose.msra.mxu0 0.0
        %778 = vmatprep.subr.mxu0 0.0
        %779 = vmatpush1.xpose.msra.mxu0 0.0
        %780 = vmatprep.subr.mxu0 0.0
        %781 = vmatpush1.xpose.msra.mxu0 0.0
        %782 = vmatprep.subr.mxu0 0.0
        %783 = vmatpush1.xpose.msra.mxu0 0.0
        %784 = vmatprep.subr.mxu0 0.0
        %785 = vmatpush1.xpose.msra.mxu0 0.0
        %786 = vmatprep.subr.mxu0 0.0
        %787 = vmatpush1.xpose.msra.mxu0 0.0
        %788 = vmatprep.subr.mxu0 0.0
        %789 = vmatpush1.xpose.msra.mxu0 0.0
        %790 = vmatprep.subr.mxu0 0.0
        %791 = vmatpush1.xpose.msra.mxu0 0.0
        %792 = vmatprep.subr.mxu0 0.0
        %793 = vmatpush1.xpose.msra.mxu0 0.0
        %794 = vmatprep.subr.mxu0 0.0
        %795 = vmatpush1.xpose.msra.mxu0 0.0
        %796 = vmatprep.subr.mxu0 0.0
        %797 = vmatpush1.xpose.msra.mxu0 0.0
        %798 = vmatprep.subr.mxu0 0.0
        %799 = vmatpush1.xpose.msra.mxu0 0.0
        %800 = vmatprep.subr.mxu0 0.0
        %801 = vmatpush1.xpose.msra.mxu0 0.0
        %802 = vmatprep.subr.mxu0 0.0
        %803 = vmatpush1.xpose.msra.mxu0 0.0
        %804 = vmatprep.subr.mxu0 0.0
        %805 = vmatpush1.xpose.msra.mxu0 0.0
        %806 = vmatprep.subr.mxu0 0.0
        %807 = vmatpush1.xpose.msra.mxu0 0.0
        %808 = vmatprep.subr.mxu0 0.0
        %809 = vmatpush1.xpose.msra.mxu0 0.0
        %810 = vmatprep.subr.mxu0 0.0
        %811 = vmatpush1.xpose.msra.mxu0 0.0
        %812 = vmatprep.subr.mxu0 0.0
        %813 = vmatpush1.xpose.msra.mxu0 0.0
        %814 = vmatprep.mubr.f32.mxu0 0.0
        %815 = vmatmul.mubr.f32.gmra.mrb[0].mxu0 %v746
        %v816 = vpop.f32.mrb[0].mxu0
        %v817 = vadd.f32 0.0, %v816
        %v818 = vpop.f32.mrb[0].mxu0
        %819 = vdwg.mxu0
        %v820 = vsel %vm581, %v817, -inf
        %821 = vmax.xlane.f32.xlu0 %v820
        %v822 = vpop.xlane.xlu0 %821
        %v823 = vsub.f32 %v817, %v822
        %v824 = vmul.f32 %v823, 1.442695
        %v825 = vpow.pop %v824
        %v826 = vsel %vm581, %v825, 0.0
        %827 = vadd.xlane.f32.xlu0 %v826
        %v828 = vpop.xlane.xlu0 %827
        %v829 = vrcp.pop %v828
        %v830 = vmul.f32 %v825, %v829
        %832 = vrot.lane.b32.xlu0 %v573, 120
        %v833 = vpop.permute.xlu0 %832
        %v836 = vsel %vm581, %v830, 0
        %838 = vmatprep.subr.mxu0 0.0
        %839 = vmatpush1.msra.mxu0 %v833
        %840 = vmatprep.subr.mxu0 0.0
        %841 = vmatpush1.msra.mxu0 0.0
        %842 = vmatprep.subr.mxu0 0.0
        %843 = vmatpush1.msra.mxu0 0.0
        %844 = vmatprep.subr.mxu0 0.0
        %845 = vmatpush1.msra.mxu0 0.0
        %846 = vmatprep.subr.mxu0 0.0
        %847 = vmatpush1.msra.mxu0 0.0
        %848 = vmatprep.subr.mxu0 0.0
        %849 = vmatpush1.msra.mxu0 0.0
        %850 = vmatprep.subr.mxu0 0.0
        %851 = vmatpush1.msra.mxu0 0.0
        %852 = vmatprep.subr.mxu0 0.0
        %853 = vmatpush1.msra.mxu0 0.0
        %854 = vmatprep.subr.mxu0 0.0
        %855 = vmatpush1.msra.mxu0 0.0
        %856 = vmatprep.subr.mxu0 0.0
        %857 = vmatpush1.msra.mxu0 0.0
        %858 = vmatprep.subr.mxu0 0.0
        %859 = vmatpush1.msra.mxu0 0.0
        %860 = vmatprep.subr.mxu0 0.0
        %861 = vmatpush1.msra.mxu0 0.0
        %862 = vmatprep.subr.mxu0 0.0
        %863 = vmatpush1.msra.mxu0 0.0
        %864 = vmatprep.subr.mxu0 0.0
        %865 = vmatpush1.msra.mxu0 0.0
        %866 = vmatprep.subr.mxu0 0.0
        %867 = vmatpush1.msra.mxu0 0.0
        %868 = vmatprep.subr.mxu0 0.0
        %869 = vmatpush1.msra.mxu0 0.0
        %870 = vmatprep.subr.mxu0 0.0
        %871 = vmatpush1.msra.mxu0 0.0
        %872 = vmatprep.subr.mxu0 0.0
        %873 = vmatpush1.msra.mxu0 0.0
        %874 = vmatprep.subr.mxu0 0.0
        %875 = vmatpush1.msra.mxu0 0.0
        %876 = vmatprep.subr.mxu0 0.0
        %877 = vmatpush1.msra.mxu0 0.0
        %878 = vmatprep.subr.mxu0 0.0
        %879 = vmatpush1.msra.mxu0 0.0
        %880 = vmatprep.subr.mxu0 0.0
        %881 = vmatpush1.msra.mxu0 0.0
        %882 = vmatprep.subr.mxu0 0.0
        %883 = vmatpush1.msra.mxu0 0.0
        %884 = vmatprep.subr.mxu0 0.0
        %885 = vmatpush1.msra.mxu0 0.0
        %886 = vmatprep.subr.mxu0 0.0
        %887 = vmatpush1.msra.mxu0 0.0
        %888 = vmatprep.subr.mxu0 0.0
        %889 = vmatpush1.msra.mxu0 0.0
        %890 = vmatprep.subr.mxu0 0.0
        %891 = vmatpush1.msra.mxu0 0.0
        %892 = vmatprep.subr.mxu0 0.0
        %893 = vmatpush1.msra.mxu0 0.0
        %894 = vmatprep.subr.mxu0 0.0
        %895 = vmatpush1.msra.mxu0 0.0
        %896 = vmatprep.subr.mxu0 0.0
        %897 = vmatpush1.msra.mxu0 0.0
        %898 = vmatprep.subr.mxu0 0.0
        %899 = vmatpush1.msra.mxu0 0.0
        %900 = vmatprep.subr.mxu0 0.0
        %901 = vmatpush1.msra.mxu0 0.0
        %902 = vmatprep.mubr.f32.mxu0 0.0
        %903 = vmatmul.mubr.f32.gmra.mrb[0].mxu0 %v836
        %v904 = vpop.f32.mrb[0].mxu0
        %v905 = vadd.f32 0.0, %v904
        %v906 = vpop.f32.mrb[0].mxu0
        %907 = vdwg.mxu0
        %v909 = vsel %vm581, %v905, 0
        %911 = vmatprep.subr.mxu0 0.0
        %912 = vmatpush1.msra.mxu0 %v578
        %913 = vmatprep.subr.mxu0 0.0
        %914 = vmatpush1.msra.mxu0 0.0
        %915 = vmatprep.subr.mxu0 0.0
        %916 = vmatpush1.msra.mxu0 0.0
        %917 = vmatprep.subr.mxu0 0.0
        %918 = vmatpush1.msra.mxu0 0.0
        %919 = vmatprep.subr.mxu0 0.0
        %920 = vmatpush1.msra.mxu0 0.0
        %921 = vmatprep.subr.mxu0 0.0
        %922 = vmatpush1.msra.mxu0 0.0
        %923 = vmatprep.subr.mxu0 0.0
        %924 = vmatpush1.msra.mxu0 0.0
        %925 = vmatprep.subr.mxu0 0.0
        %926 = vmatpush1.msra.mxu0 0.0
        %927 = vmatprep.subr.mxu0 0.0
        %928 = vmatpush1.msra.mxu0 0.0
        %929 = vmatprep.subr.mxu0 0.0
        %930 = vmatpush1.msra.mxu0 0.0
        %931 = vmatprep.subr.mxu0 0.0
        %932 = vmatpush1.msra.mxu0 0.0
        %933 = vmatprep.subr.mxu0 0.0
        %934 = vmatpush1.msra.mxu0 0.0
        %935 = vmatprep.subr.mxu0 0.0
        %936 = vmatpush1.msra.mxu0 0.0
        %937 = vmatprep.subr.mxu0 0.0
        %938 = vmatpush1.msra.mxu0 0.0
        %939 = vmatprep.subr.mxu0 0.0
        %940 = vmatpush1.msra.mxu0 0.0
        %941 = vmatprep.subr.mxu0 0.0
        %942 = vmatpush1.msra.mxu0 0.0
        %943 = vmatprep.subr.mxu0 0.0
        %944 = vmatpush1.msra.mxu0 0.0
        %945 = vmatprep.subr.mxu0 0.0
        %946 = vmatpush1.msra.mxu0 0.0
        %947 = vmatprep.subr.mxu0 0.0
        %948 = vmatpush1.msra.mxu0 0.0
        %949 = vmatprep.subr.mxu0 0.0
        %950 = vmatpush1.msra.mxu0 0.0
        %951 = vmatprep.subr.mxu0 0.0
        %952 = vmatpush1.msra.mxu0 0.0
        %953 = vmatprep.subr.mxu0 0.0
        %954 = vmatpush1.msra.mxu0 0.0
        %955 = vmatprep.subr.mxu0 0.0
        %956 = vmatpush1.msra.mxu0 0.0
        %957 = vmatprep.subr.mxu0 0.0
        %958 = vmatpush1.msra.mxu0 0.0
        %959 = vmatprep.subr.mxu0 0.0
        %960 = vmatpush1.msra.mxu0 0.0
        %961 = vmatprep.subr.mxu0 0.0
        %962 = vmatpush1.msra.mxu0 0.0
        %963 = vmatprep.subr.mxu0 0.0
        %964 = vmatpush1.msra.mxu0 0.0
        %965 = vmatprep.subr.mxu0 0.0
        %966 = vmatpush1.msra.mxu0 0.0
        %967 = vmatprep.subr.mxu0 0.0
        %968 = vmatpush1.msra.mxu0 0.0
        %969 = vmatprep.subr.mxu0 0.0
        %970 = vmatpush1.msra.mxu0 0.0
        %971 = vmatprep.subr.mxu0 0.0
        %972 = vmatpush1.msra.mxu0 0.0
        %973 = vmatprep.subr.mxu0 0.0
        %974 = vmatpush1.msra.mxu0 0.0
        %975 = vmatprep.mubr.f32.mxu0 0.0
        %976 = vmatmul.mubr.f32.gmra.mrb[0].mxu0 %v909
        %v977 = vpop.f32.mrb[0].mxu0
        %v978 = vadd.f32 0.0, %v977
        %v979 = vpop.f32.mrb[0].mxu0
        %980 = vdwg.mxu0
        %v982 = vsel %vm581, %v739, 0
        %984 = vmatprep.subr.mxu0 0.0
        %985 = vmatpush1.msra.mxu0 %v577
        %986 = vmatprep.subr.mxu0 0.0
        %987 = vmatpush1.msra.mxu0 0.0
        %988 = vmatprep.subr.mxu0 0.0
        %989 = vmatpush1.msra.mxu0 0.0
        %990 = vmatprep.subr.mxu0 0.0
        %991 = vmatpush1.msra.mxu0 0.0
        %992 = vmatprep.subr.mxu0 0.0
        %993 = vmatpush1.msra.mxu0 0.0
        %994 = vmatprep.subr.mxu0 0.0
        %995 = vmatpush1.msra.mxu0 0.0
        %996 = vmatprep.subr.mxu0 0.0
        %997 = vmatpush1.msra.mxu0 0.0
        %998 = vmatprep.subr.mxu0 0.0
        %999 = vmatpush1.msra.mxu0 0.0
        %1000 = vmatprep.subr.mxu0 0.0
        %1001 = vmatpush1.msra.mxu0 0.0
        %1002 = vmatprep.subr.mxu0 0.0
        %1003 = vmatpush1.msra.mxu0 0.0
        %1004 = vmatprep.subr.mxu0 0.0
        %1005 = vmatpush1.msra.mxu0 0.0
        %1006 = vmatprep.subr.mxu0 0.0
        %1007 = vmatpush1.msra.mxu0 0.0
        %1008 = vmatprep.subr.mxu0 0.0
        %1009 = vmatpush1.msra.mxu0 0.0
        %1010 = vmatprep.subr.mxu0 0.0
        %1011 = vmatpush1.msra.mxu0 0.0
        %1012 = vmatprep.subr.mxu0 0.0
        %1013 = vmatpush1.msra.mxu0 0.0
        %1014 = vmatprep.subr.mxu0 0.0
        %1015 = vmatpush1.msra.mxu0 0.0
        %1016 = vmatprep.subr.mxu0 0.0
        %1017 = vmatpush1.msra.mxu0 0.0
        %1018 = vmatprep.subr.mxu0 0.0
        %1019 = vmatpush1.msra.mxu0 0.0
        %1020 = vmatprep.subr.mxu0 0.0
        %1021 = vmatpush1.msra.mxu0 0.0
        %1022 = vmatprep.subr.mxu0 0.0
        %1023 = vmatpush1.msra.mxu0 0.0
        %1024 = vmatprep.subr.mxu0 0.0
        %1025 = vmatpush1.msra.mxu0 0.0
        %1026 = vmatprep.subr.mxu0 0.0
        %1027 = vmatpush1.msra.mxu0 0.0
        %1028 = vmatprep.subr.mxu0 0.0
        %1029 = vmatpush1.msra.mxu0 0.0
        %1030 = vmatprep.subr.mxu0 0.0
        %1031 = vmatpush1.msra.mxu0 0.0
        %1032 = vmatprep.subr.mxu0 0.0
        %1033 = vmatpush1.msra.mxu0 0.0
        %1034 = vmatprep.subr.mxu0 0.0
        %1035 = vmatpush1.msra.mxu0 0.0
        %1036 = vmatprep.subr.mxu0 0.0
        %1037 = vmatpush1.msra.mxu0 0.0
        %1038 = vmatprep.subr.mxu0 0.0
        %1039 = vmatpush1.msra.mxu0 0.0
        %1040 = vmatprep.subr.mxu0 0.0
        %1041 = vmatpush1.msra.mxu0 0.0
        %1042 = vmatprep.subr.mxu0 0.0
        %1043 = vmatpush1.msra.mxu0 0.0
        %1044 = vmatprep.subr.mxu0 0.0
        %1045 = vmatpush1.msra.mxu0 0.0
        %1046 = vmatprep.subr.mxu0 0.0
        %1047 = vmatpush1.msra.mxu0 0.0
        %1048 = vmatprep.mubr.f32.mxu0 0.0
        %1049 = vmatmul.mubr.f32.gmra.mrb[0].mxu0 %v982
        %v1050 = vpop.f32.mrb[0].mxu0
        %v1051 = vadd.f32 %v978, %v1050
        %v1052 = vpop.f32.mrb[0].mxu0
        %1053 = vdwg.mxu0
        %1054 = vrot.lane.b32.xlu0 %v409, 112
        %v1055 = vpop.permute.xlu0 %1054
        %1056 = vrot.lane.b32.xlu0 %v491, 112
        %v1057 = vpop.permute.xlu0 %1056
        %v1058 = vsel %vm581, %v1055, 0
        %v1060 = vsel %vm581, %v1057, 0
        %1062 = vmatprep.subr.mxu0 0.0
        %1063 = vmatpush1.xpose.msra.mxu0 %v1060
        %1064 = vmatprep.subr.mxu0 0.0
        %1065 = vmatpush1.xpose.msra.mxu0 0.0
        %1066 = vmatprep.subr.mxu0 0.0
        %1067 = vmatpush1.xpose.msra.mxu0 0.0
        %1068 = vmatprep.subr.mxu0 0.0
        %1069 = vmatpush1.xpose.msra.mxu0 0.0
        %1070 = vmatprep.subr.mxu0 0.0
        %1071 = vmatpush1.xpose.msra.mxu0 0.0
        %1072 = vmatprep.subr.mxu0 0.0
        %1073 = vmatpush1.xpose.msra.mxu0 0.0
        %1074 = vmatprep.subr.mxu0 0.0
        %1075 = vmatpush1.xpose.msra.mxu0 0.0
        %1076 = vmatprep.subr.mxu0 0.0
        %1077 = vmatpush1.xpose.msra.mxu0 0.0
        %1078 = vmatprep.subr.mxu0 0.0
        %1079 = vmatpush1.xpose.msra.mxu0 0.0
        %1080 = vmatprep.subr.mxu0 0.0
        %1081 = vmatpush1.xpose.msra.mxu0 0.0
        %1082 = vmatprep.subr.mxu0 0.0
        %1083 = vmatpush1.xpose.msra.mxu0 0.0
        %1084 = vmatprep.subr.mxu0 0.0
        %1085 = vmatpush1.xpose.msra.mxu0 0.0
        %1086 = vmatprep.subr.mxu0 0.0
        %1087 = vmatpush1.xpose.msra.mxu0 0.0
        %1088 = vmatprep.subr.mxu0 0.0
        %1089 = vmatpush1.xpose.msra.mxu0 0.0
        %1090 = vmatprep.subr.mxu0 0.0
        %1091 = vmatpush1.xpose.msra.mxu0 0.0
        %1092 = vmatprep.subr.mxu0 0.0
        %1093 = vmatpush1.xpose.msra.mxu0 0.0
        %1094 = vmatprep.subr.mxu0 0.0
        %1095 = vmatpush1.xpose.msra.mxu0 0.0
        %1096 = vmatprep.subr.mxu0 0.0
        %1097 = vmatpush1.xpose.msra.mxu0 0.0
        %1098 = vmatprep.subr.mxu0 0.0
        %1099 = vmatpush1.xpose.msra.mxu0 0.0
        %1100 = vmatprep.subr.mxu0 0.0
        %1101 = vmatpush1.xpose.msra.mxu0 0.0
        %1102 = vmatprep.subr.mxu0 0.0
        %1103 = vmatpush1.xpose.msra.mxu0 0.0
        %1104 = vmatprep.subr.mxu0 0.0
        %1105 = vmatpush1.xpose.msra.mxu0 0.0
        %1106 = vmatprep.subr.mxu0 0.0
        %1107 = vmatpush1.xpose.msra.mxu0 0.0
        %1108 = vmatprep.subr.mxu0 0.0
        %1109 = vmatpush1.xpose.msra.mxu0 0.0
        %1110 = vmatprep.subr.mxu0 0.0
        %1111 = vmatpush1.xpose.msra.mxu0 0.0
        %1112 = vmatprep.subr.mxu0 0.0
        %1113 = vmatpush1.xpose.msra.mxu0 0.0
        %1114 = vmatprep.subr.mxu0 0.0
        %1115 = vmatpush1.xpose.msra.mxu0 0.0
        %1116 = vmatprep.subr.mxu0 0.0
        %1117 = vmatpush1.xpose.msra.mxu0 0.0
        %1118 = vmatprep.subr.mxu0 0.0
        %1119 = vmatpush1.xpose.msra.mxu0 0.0
        %1120 = vmatprep.subr.mxu0 0.0
        %1121 = vmatpush1.xpose.msra.mxu0 0.0
        %1122 = vmatprep.subr.mxu0 0.0
        %1123 = vmatpush1.xpose.msra.mxu0 0.0
        %1124 = vmatprep.subr.mxu0 0.0
        %1125 = vmatpush1.xpose.msra.mxu0 0.0
        %1126 = vmatprep.mubr.f32.mxu0 0.0
        %1127 = vmatmul.mubr.f32.gmra.mrb[0].mxu0 %v1058
        %v1128 = vpop.f32.mrb[0].mxu0
        %v1129 = vadd.f32 0.0, %v1128
        %v1130 = vpop.f32.mrb[0].mxu0
        %1131 = vdwg.mxu0
        %v1132 = vsel %vm581, %v1129, -inf
        %1133 = vmax.xlane.f32.xlu0 %v1132
        %v1134 = vpop.xlane.xlu0 %1133
        %v1135 = vsub.f32 %v1129, %v1134
        %v1136 = vmul.f32 %v1135, 1.442695
        %v1137 = vpow.pop %v1136
        %v1138 = vsel %vm581, %v1137, 0.0
        %1139 = vadd.xlane.f32.xlu0 %v1138
        %v1140 = vpop.xlane.xlu0 %1139
        %v1141 = vrcp.pop %v1140
        %v1142 = vmul.f32 %v1137, %v1141
        %1143 = vrot.lane.b32.xlu0 %v573, 112
        %v1144 = vpop.permute.xlu0 %1143
        %v1147 = vsel %vm581, %v1142, 0
        %1149 = vmatprep.subr.mxu0 0.0
        %1150 = vmatpush1.msra.mxu0 %v1144
        %1151 = vmatprep.subr.mxu0 0.0
        %1152 = vmatpush1.msra.mxu0 0.0
        %1153 = vmatprep.subr.mxu0 0.0
        %1154 = vmatpush1.msra.mxu0 0.0
        %1155 = vmatprep.subr.mxu0 0.0
        %1156 = vmatpush1.msra.mxu0 0.0
        %1157 = vmatprep.subr.mxu0 0.0
        %1158 = vmatpush1.msra.mxu0 0.0
        %1159 = vmatprep.subr.mxu0 0.0
        %1160 = vmatpush1.msra.mxu0 0.0
        %1161 = vmatprep.subr.mxu0 0.0
        %1162 = vmatpush1.msra.mxu0 0.0
        %1163 = vmatprep.subr.mxu0 0.0
        %1164 = vmatpush1.msra.mxu0 0.0
        %1165 = vmatprep.subr.mxu0 0.0
        %1166 = vmatpush1.msra.mxu0 0.0
        %1167 = vmatprep.subr.mxu0 0.0
        %1168 = vmatpush1.msra.mxu0 0.0
        %1169 = vmatprep.subr.mxu0 0.0
        %1170 = vmatpush1.msra.mxu0 0.0
        %1171 = vmatprep.subr.mxu0 0.0
        %1172 = vmatpush1.msra.mxu0 0.0
        %1173 = vmatprep.subr.mxu0 0.0
        %1174 = vmatpush1.msra.mxu0 0.0
        %1175 = vmatprep.subr.mxu0 0.0
        %1176 = vmatpush1.msra.mxu0 0.0
        %1177 = vmatprep.subr.mxu0 0.0
        %1178 = vmatpush1.msra.mxu0 0.0
        %1179 = vmatprep.subr.mxu0 0.0
        %1180 = vmatpush1.msra.mxu0 0.0
        %1181 = vmatprep.subr.mxu0 0.0
        %1182 = vmatpush1.msra.mxu0 0.0
        %1183 = vmatprep.subr.mxu0 0.0
        %1184 = vmatpush1.msra.mxu0 0.0
        %1185 = vmatprep.subr.mxu0 0.0
        %1186 = vmatpush1.msra.mxu0 0.0
        %1187 = vmatprep.subr.mxu0 0.0
        %1188 = vmatpush1.msra.mxu0 0.0
        %1189 = vmatprep.subr.mxu0 0.0
        %1190 = vmatpush1.msra.mxu0 0.0
        %1191 = vmatprep.subr.mxu0 0.0
        %1192 = vmatpush1.msra.mxu0 0.0
        %1193 = vmatprep.subr.mxu0 0.0
        %1194 = vmatpush1.msra.mxu0 0.0
        %1195 = vmatprep.subr.mxu0 0.0
        %1196 = vmatpush1.msra.mxu0 0.0
        %1197 = vmatprep.subr.mxu0 0.0
        %1198 = vmatpush1.msra.mxu0 0.0
        %1199 = vmatprep.subr.mxu0 0.0
        %1200 = vmatpush1.msra.mxu0 0.0
        %1201 = vmatprep.subr.mxu0 0.0
        %1202 = vmatpush1.msra.mxu0 0.0
        %1203 = vmatprep.subr.mxu0 0.0
        %1204 = vmatpush1.msra.mxu0 0.0
        %1205 = vmatprep.subr.mxu0 0.0
        %1206 = vmatpush1.msra.mxu0 0.0
        %1207 = vmatprep.subr.mxu0 0.0
        %1208 = vmatpush1.msra.mxu0 0.0
        %1209 = vmatprep.subr.mxu0 0.0
        %1210 = vmatpush1.msra.mxu0 0.0
        %1211 = vmatprep.subr.mxu0 0.0
        %1212 = vmatpush1.msra.mxu0 0.0
        %1213 = vmatprep.mubr.f32.mxu0 0.0
        %1214 = vmatmul.mubr.f32.gmra.mrb[0].mxu0 %v1147
        %v1215 = vpop.f32.mrb[0].mxu0
        %v1216 = vadd.f32 0.0, %v1215
        %v1217 = vpop.f32.mrb[0].mxu0
        %1218 = vdwg.mxu0
        %v1220 = vsel %vm581, %v1216, 0
        %1222 = vmatprep.subr.mxu0 0.0
        %1223 = vmatpush1.msra.mxu0 %v579
        %1224 = vmatprep.subr.mxu0 0.0
        %1225 = vmatpush1.msra.mxu0 0.0
        %1226 = vmatprep.subr.mxu0 0.0
        %1227 = vmatpush1.msra.mxu0 0.0
        %1228 = vmatprep.subr.mxu0 0.0
        %1229 = vmatpush1.msra.mxu0 0.0
        %1230 = vmatprep.subr.mxu0 0.0
        %1231 = vmatpush1.msra.mxu0 0.0
        %1232 = vmatprep.subr.mxu0 0.0
        %1233 = vmatpush1.msra.mxu0 0.0
        %1234 = vmatprep.subr.mxu0 0.0
        %1235 = vmatpush1.msra.mxu0 0.0
        %1236 = vmatprep.subr.mxu0 0.0
        %1237 = vmatpush1.msra.mxu0 0.0
        %1238 = vmatprep.subr.mxu0 0.0
        %1239 = vmatpush1.msra.mxu0 0.0
        %1240 = vmatprep.subr.mxu0 0.0
        %1241 = vmatpush1.msra.mxu0 0.0
        %1242 = vmatprep.subr.mxu0 0.0
        %1243 = vmatpush1.msra.mxu0 0.0
        %1244 = vmatprep.subr.mxu0 0.0
        %1245 = vmatpush1.msra.mxu0 0.0
        %1246 = vmatprep.subr.mxu0 0.0
        %1247 = vmatpush1.msra.mxu0 0.0
        %1248 = vmatprep.subr.mxu0 0.0
        %1249 = vmatpush1.msra.mxu0 0.0
        %1250 = vmatprep.subr.mxu0 0.0
        %1251 = vmatpush1.msra.mxu0 0.0
        %1252 = vmatprep.subr.mxu0 0.0
        %1253 = vmatpush1.msra.mxu0 0.0
        %1254 = vmatprep.subr.mxu0 0.0
        %1255 = vmatpush1.msra.mxu0 0.0
        %1256 = vmatprep.subr.mxu0 0.0
        %1257 = vmatpush1.msra.mxu0 0.0
        %1258 = vmatprep.subr.mxu0 0.0
        %1259 = vmatpush1.msra.mxu0 0.0
        %1260 = vmatprep.subr.mxu0 0.0
        %1261 = vmatpush1.msra.mxu0 0.0
        %1262 = vmatprep.subr.mxu0 0.0
        %1263 = vmatpush1.msra.mxu0 0.0
        %1264 = vmatprep.subr.mxu0 0.0
        %1265 = vmatpush1.msra.mxu0 0.0
        %1266 = vmatprep.subr.mxu0 0.0
        %1267 = vmatpush1.msra.mxu0 0.0
        %1268 = vmatprep.subr.mxu0 0.0
        %1269 = vmatpush1.msra.mxu0 0.0
        %1270 = vmatprep.subr.mxu0 0.0
        %1271 = vmatpush1.msra.mxu0 0.0
        %1272 = vmatprep.subr.mxu0 0.0
        %1273 = vmatpush1.msra.mxu0 0.0
        %1274 = vmatprep.subr.mxu0 0.0
        %1275 = vmatpush1.msra.mxu0 0.0
        %1276 = vmatprep.subr.mxu0 0.0
        %1277 = vmatpush1.msra.mxu0 0.0
        %1278 = vmatprep.subr.mxu0 0.0
        %1279 = vmatpush1.msra.mxu0 0.0
        %1280 = vmatprep.subr.mxu0 0.0
        %1281 = vmatpush1.msra.mxu0 0.0
        %1282 = vmatprep.subr.mxu0 0.0
        %1283 = vmatpush1.msra.mxu0 0.0
        %1284 = vmatprep.subr.mxu0 0.0
        %1285 = vmatpush1.msra.mxu0 0.0
        %1286 = vmatprep.mubr.f32.mxu0 0.0
        %1287 = vmatmul.mubr.f32.gmra.mrb[0].mxu0 %v1220
        %v1288 = vpop.f32.mrb[0].mxu0
        %v1289 = vadd.f32 0.0, %v1288
        %v1290 = vpop.f32.mrb[0].mxu0
        %1291 = vdwg.mxu0
        %v1292 = vadd.f32 %v1051, %v1289
        %1293 = vrot.lane.b32.xlu0 %v409, 104
        %v1294 = vpop.permute.xlu0 %1293
        %1295 = vrot.lane.b32.xlu0 %v491, 104
        %v1296 = vpop.permute.xlu0 %1295
        %v1297 = vsel %vm581, %v1294, 0
        %v1299 = vsel %vm581, %v1296, 0
        %1301 = vmatprep.subr.mxu0 0.0
        %1302 = vmatpush1.xpose.msra.mxu0 %v1299
        %1303 = vmatprep.subr.mxu0 0.0
        %1304 = vmatpush1.xpose.msra.mxu0 0.0
        %1305 = vmatprep.subr.mxu0 0.0
        %1306 = vmatpush1.xpose.msra.mxu0 0.0
        %1307 = vmatprep.subr.mxu0 0.0
        %1308 = vmatpush1.xpose.msra.mxu0 0.0
        %1309 = vmatprep.subr.mxu0 0.0
        %1310 = vmatpush1.xpose.msra.mxu0 0.0
        %1311 = vmatprep.subr.mxu0 0.0
        %1312 = vmatpush1.xpose.msra.mxu0 0.0
        %1313 = vmatprep.subr.mxu0 0.0
        %1314 = vmatpush1.xpose.msra.mxu0 0.0
        %1315 = vmatprep.subr.mxu0 0.0
        %1316 = vmatpush1.xpose.msra.mxu0 0.0
        %1317 = vmatprep.subr.mxu0 0.0
        %1318 = vmatpush1.xpose.msra.mxu0 0.0
        %1319 = vmatprep.subr.mxu0 0.0
        %1320 = vmatpush1.xpose.msra.mxu0 0.0
        %1321 = vmatprep.subr.mxu0 0.0
        %1322 = vmatpush1.xpose.msra.mxu0 0.0
        %1323 = vmatprep.subr.mxu0 0.0
        %1324 = vmatpush1.xpose.msra.mxu0 0.0
        %1325 = vmatprep.subr.mxu0 0.0
        %1326 = vmatpush1.xpose.msra.mxu0 0.0
        %1327 = vmatprep.subr.mxu0 0.0
        %1328 = vmatpush1.xpose.msra.mxu0 0.0
        %1329 = vmatprep.subr.mxu0 0.0
        %1330 = vmatpush1.xpose.msra.mxu0 0.0
        %1331 = vmatprep.subr.mxu0 0.0
        %1332 = vmatpush1.xpose.msra.mxu0 0.0
        %1333 = vmatprep.subr.mxu0 0.0
        %1334 = vmatpush1.xpose.msra.mxu0 0.0
        %1335 = vmatprep.subr.mxu0 0.0
        %1336 = vmatpush1.xpose.msra.mxu0 0.0
        %1337 = vmatprep.subr.mxu0 0.0
        %1338 = vmatpush1.xpose.msra.mxu0 0.0
        %1339 = vmatprep.subr.mxu0 0.0
        %1340 = vmatpush1.xpose.msra.mxu0 0.0
        %1341 = vmatprep.subr.mxu0 0.0
        %1342 = vmatpush1.xpose.msra.mxu0 0.0
        %1343 = vmatprep.subr.mxu0 0.0
        %1344 = vmatpush1.xpose.msra.mxu0 0.0
        %1345 = vmatprep.subr.mxu0 0.0
        %1346 = vmatpush1.xpose.msra.mxu0 0.0
        %1347 = vmatprep.subr.mxu0 0.0
        %1348 = vmatpush1.xpose.msra.mxu0 0.0
        %1349 = vmatprep.subr.mxu0 0.0
        %1350 = vmatpush1.xpose.msra.mxu0 0.0
        %1351 = vmatprep.subr.mxu0 0.0
        %1352 = vmatpush1.xpose.msra.mxu0 0.0
        %1353 = vmatprep.subr.mxu0 0.0
        %1354 = vmatpush1.xpose.msra.mxu0 0.0
        %1355 = vmatprep.subr.mxu0 0.0
        %1356 = vmatpush1.xpose.msra.mxu0 0.0
        %1357 = vmatprep.subr.mxu0 0.0
        %1358 = vmatpush1.xpose.msra.mxu0 0.0
        %1359 = vmatprep.subr.mxu0 0.0
        %1360 = vmatpush1.xpose.msra.mxu0 0.0
        %1361 = vmatprep.subr.mxu0 0.0
        %1362 = vmatpush1.xpose.msra.mxu0 0.0
        %1363 = vmatprep.subr.mxu0 0.0
        %1364 = vmatpush1.xpose.msra.mxu0 0.0
        %1365 = vmatprep.mubr.f32.mxu0 0.0
        %1366 = vmatmul.mubr.f32.gmra.mrb[0].mxu0 %v1297
        %v1367 = vpop.f32.mrb[0].mxu0
        %v1368 = vadd.f32 0.0, %v1367
        %v1369 = vpop.f32.mrb[0].mxu0
        %1370 = vdwg.mxu0
        %v1371 = vsel %vm581, %v1368, -inf
        %1372 = vmax.xlane.f32.xlu0 %v1371
        %v1373 = vpop.xlane.xlu0 %1372
        %v1374 = vsub.f32 %v1368, %v1373
        %v1375 = vmul.f32 %v1374, 1.442695
        %v1376 = vpow.pop %v1375
        %v1377 = vsel %vm581, %v1376, 0.0
        %1378 = vadd.xlane.f32.xlu0 %v1377
        %v1379 = vpop.xlane.xlu0 %1378
        %v1380 = vrcp.pop %v1379
        %v1381 = vmul.f32 %v1376, %v1380
        %1382 = vrot.lane.b32.xlu0 %v573, 104
        %v1383 = vpop.permute.xlu0 %1382
        %v1386 = vsel %vm581, %v1381, 0
        %1388 = vmatprep.subr.mxu0 0.0
        %1389 = vmatpush1.msra.mxu0 %v1383
        %1390 = vmatprep.subr.mxu0 0.0
        %1391 = vmatpush1.msra.mxu0 0.0
        %1392 = vmatprep.subr.mxu0 0.0
        %1393 = vmatpush1.msra.mxu0 0.0
        %1394 = vmatprep.subr.mxu0 0.0
        %1395 = vmatpush1.msra.mxu0 0.0
        %1396 = vmatprep.subr.mxu0 0.0
        %1397 = vmatpush1.msra.mxu0 0.0
        %1398 = vmatprep.subr.mxu0 0.0
        %1399 = vmatpush1.msra.mxu0 0.0
        %1400 = vmatprep.subr.mxu0 0.0
        %1401 = vmatpush1.msra.mxu0 0.0
        %1402 = vmatprep.subr.mxu0 0.0
        %1403 = vmatpush1.msra.mxu0 0.0
        %1404 = vmatprep.subr.mxu0 0.0
        %1405 = vmatpush1.msra.mxu0 0.0
        %1406 = vmatprep.subr.mxu0 0.0
        %1407 = vmatpush1.msra.mxu0 0.0
        %1408 = vmatprep.subr.mxu0 0.0
        %1409 = vmatpush1.msra.mxu0 0.0
        %1410 = vmatprep.subr.mxu0 0.0
        %1411 = vmatpush1.msra.mxu0 0.0
        %1412 = vmatprep.subr.mxu0 0.0
        %1413 = vmatpush1.msra.mxu0 0.0
        %1414 = vmatprep.subr.mxu0 0.0
        %1415 = vmatpush1.msra.mxu0 0.0
        %1416 = vmatprep.subr.mxu0 0.0
        %1417 = vmatpush1.msra.mxu0 0.0
        %1418 = vmatprep.subr.mxu0 0.0
        %1419 = vmatpush1.msra.mxu0 0.0
        %1420 = vmatprep.subr.mxu0 0.0
        %1421 = vmatpush1.msra.mxu0 0.0
        %1422 = vmatprep.subr.mxu0 0.0
        %1423 = vmatpush1.msra.mxu0 0.0
        %1424 = vmatprep.subr.mxu0 0.0
        %1425 = vmatpush1.msra.mxu0 0.0
        %1426 = vmatprep.subr.mxu0 0.0
        %1427 = vmatpush1.msra.mxu0 0.0
        %1428 = vmatprep.subr.mxu0 0.0
        %1429 = vmatpush1.msra.mxu0 0.0
        %1430 = vmatprep.subr.mxu0 0.0
        %1431 = vmatpush1.msra.mxu0 0.0
        %1432 = vmatprep.subr.mxu0 0.0
        %1433 = vmatpush1.msra.mxu0 0.0
        %1434 = vmatprep.subr.mxu0 0.0
        %1435 = vmatpush1.msra.mxu0 0.0
        %1436 = vmatprep.subr.mxu0 0.0
        %1437 = vmatpush1.msra.mxu0 0.0
        %1438 = vmatprep.subr.mxu0 0.0
        %1439 = vmatpush1.msra.mxu0 0.0
        %1440 = vmatprep.subr.mxu0 0.0
        %1441 = vmatpush1.msra.mxu0 0.0
        %1442 = vmatprep.subr.mxu0 0.0
        %1443 = vmatpush1.msra.mxu0 0.0
        %1444 = vmatprep.subr.mxu0 0.0
        %1445 = vmatpush1.msra.mxu0 0.0
        %1446 = vmatprep.subr.mxu0 0.0
        %1447 = vmatpush1.msra.mxu0 0.0
        %1448 = vmatprep.subr.mxu0 0.0
        %1449 = vmatpush1.msra.mxu0 0.0
        %1450 = vmatprep.subr.mxu0 0.0
        %1451 = vmatpush1.msra.mxu0 0.0
        %1452 = vmatprep.mubr.f32.mxu0 0.0
        %1453 = vmatmul.mubr.f32.gmra.mrb[0].mxu0 %v1386
        %v1454 = vpop.f32.mrb[0].mxu0
        %v1455 = vadd.f32 0.0, %v1454
        %v1456 = vpop.f32.mrb[0].mxu0
        %1457 = vdwg.mxu0
        %v1459 = vsel %vm581, %v1455, 0
        %1461 = vmatprep.subr.mxu0 0.0
        %1462 = vmatpush1.msra.mxu0 %v580
        %1463 = vmatprep.subr.mxu0 0.0
        %1464 = vmatpush1.msra.mxu0 0.0
        %1465 = vmatprep.subr.mxu0 0.0
        %1466 = vmatpush1.msra.mxu0 0.0
        %1467 = vmatprep.subr.mxu0 0.0
        %1468 = vmatpush1.msra.mxu0 0.0
        %1469 = vmatprep.subr.mxu0 0.0
        %1470 = vmatpush1.msra.mxu0 0.0
        %1471 = vmatprep.subr.mxu0 0.0
        %1472 = vmatpush1.msra.mxu0 0.0
        %1473 = vmatprep.subr.mxu0 0.0
        %1474 = vmatpush1.msra.mxu0 0.0
        %1475 = vmatprep.subr.mxu0 0.0
        %1476 = vmatpush1.msra.mxu0 0.0
        %1477 = vmatprep.subr.mxu0 0.0
        %1478 = vmatpush1.msra.mxu0 0.0
        %1479 = vmatprep.subr.mxu0 0.0
        %1480 = vmatpush1.msra.mxu0 0.0
        %1481 = vmatprep.subr.mxu0 0.0
        %1482 = vmatpush1.msra.mxu0 0.0
        %1483 = vmatprep.subr.mxu0 0.0
        %1484 = vmatpush1.msra.mxu0 0.0
        %1485 = vmatprep.subr.mxu0 0.0
        %1486 = vmatpush1.msra.mxu0 0.0
        %1487 = vmatprep.subr.mxu0 0.0
        %1488 = vmatpush1.msra.mxu0 0.0
        %1489 = vmatprep.subr.mxu0 0.0
        %1490 = vmatpush1.msra.mxu0 0.0
        %1491 = vmatprep.subr.mxu0 0.0
        %1492 = vmatpush1.msra.mxu0 0.0
        %1493 = vmatprep.subr.mxu0 0.0
        %1494 = vmatpush1.msra.mxu0 0.0
        %1495 = vmatprep.subr.mxu0 0.0
        %1496 = vmatpush1.msra.mxu0 0.0
        %1497 = vmatprep.subr.mxu0 0.0
        %1498 = vmatpush1.msra.mxu0 0.0
        %1499 = vmatprep.subr.mxu0 0.0
        %1500 = vmatpush1.msra.mxu0 0.0
        %1501 = vmatprep.subr.mxu0 0.0
        %1502 = vmatpush1.msra.mxu0 0.0
        %1503 = vmatprep.subr.mxu0 0.0
        %1504 = vmatpush1.msra.mxu0 0.0
        %1505 = vmatprep.subr.mxu0 0.0
        %1506 = vmatpush1.msra.mxu0 0.0
        %1507 = vmatprep.subr.mxu0 0.0
        %1508 = vmatpush1.msra.mxu0 0.0
        %1509 = vmatprep.subr.mxu0 0.0
        %1510 = vmatpush1.msra.mxu0 0.0
        %1511 = vmatprep.subr.mxu0 0.0
        %1512 = vmatpush1.msra.mxu0 0.0
        %1513 = vmatprep.subr.mxu0 0.0
        %1514 = vmatpush1.msra.mxu0 0.0
        %1515 = vmatprep.subr.mxu0 0.0
        %1516 = vmatpush1.msra.mxu0 0.0
        %1517 = vmatprep.subr.mxu0 0.0
        %1518 = vmatpush1.msra.mxu0 0.0
        %1519 = vmatprep.subr.mxu0 0.0
        %1520 = vmatpush1.msra.mxu0 0.0
        %1521 = vmatprep.subr.mxu0 0.0
        %1522 = vmatpush1.msra.mxu0 0.0
        %1523 = vmatprep.subr.mxu0 0.0
        %1524 = vmatpush1.msra.mxu0 0.0
        %1525 = vmatprep.mubr.f32.mxu0 0.0
        %1526 = vmatmul.mubr.f32.gmra.mrb[0].mxu0 %v1459
        %v1527 = vpop.f32.mrb[0].mxu0
        %v1528 = vadd.f32 0.0, %v1527
        %v1529 = vpop.f32.mrb[0].mxu0
        %1530 = vdwg.mxu0
        %v1531 = vadd.f32 %v1292, %v1528
        %v1532 = vlaneseq
        %v1533 = vshrl.u32 %v1532, 7
        %v1534 = vsub.s32 3, %v1533
        %v1535 = vrot.slane %v329, %v1534
        %v1536 = vadd.f32 %v1531, %v1535
        %1537 = vst.msk [vmem:[%s325] sm:$0xff] %vm338, %v1536
        %s1538 = sand.u32 %s154, 1
        %s1539 = scalar_lea.sflag [#allocation4], %s1538
        %s1540 = sand.u32 %s154, 1
        %s1541 = smul.addr %s1540, 8
        %s1542 = scalar_lea.vmem [#allocation10], %s1541
        // Predicated region
        $region57: #{tpu_custom_call.1} parent=39 // pred_check
          %p1543 = pneg %p164
        $region58: #{tpu_custom_call.1} parent=39 // pred_check_branch
          %1545 = sbr.rel (%p1543) target = $region60
        $region59: #{tpu_custom_call.1} parent=39 // pred_region
          %s1547 = ssub.s32 128, 128
          %1548 = vsyncadd %s1539, %s1547
          %s1549 = smul.addr %s26, 128
          %s1550 = scalar_lea.hbm %s5, %s1549
          %s1552 = sshll.u32 %s1542, 4
          %s1553 = int_to_ptr.vmem [resolvable:$true] %s1552
          %1555 = dma.vmem_to_hbm [thread:$0]  %s1553, 128, %s1550, %s1539
        $region60: #{tpu_custom_call.1} parent=39 // pred_fallthru
          _
      $region40: #{tpu_custom_call.1} parent=5 // pred_fallthru
        _
      %p1556 = scmp.le.s32.totalorder 2, %s21
      // Predicated region
      $region61: #{tpu_custom_call.1} parent=5 // pred_check
        %p1557 = pneg %p1556
      $region62: #{tpu_custom_call.1} parent=5 // pred_check_branch
        %1559 = sbr.rel (%p1557) target = $region64
      $region63: #{tpu_custom_call.1} parent=5 // pred_region
        %s1560 = ssub.s32 %s21, 2
        // Predicated region
        $region65: #{tpu_custom_call.1} parent=63 // pred_check
          %p1561 = pneg %p170
        $region66: #{tpu_custom_call.1} parent=63 // pred_check_branch
          %1563 = sbr.rel (%p1561) target = $region68
        $region67: #{tpu_custom_call.1} parent=63 // pred_region
          %s1564 = sand.u32 %s155, 1
          %s1565 = scalar_lea.sflag [#allocation4], %s1564
          %s1566 = sand.u32 %s155, 1
          %s1567 = smul.addr %s1566, 8
          %s1568 = scalar_lea.vmem [#allocation10], %s1567
          %1569 = dma.done %s1565, 128
        $region68: #{tpu_custom_call.1} parent=63 // pred_fallthru
          _
      $region64: #{tpu_custom_call.1} parent=5 // pred_fallthru
        _
    $region6: #{tpu_custom_call.1} parent=1 // loop_footer
      %s25 = sadd.s32 1, %s21
    $region7: #{tpu_custom_call.1} parent=1 // loop_footer_branch
      %20 = sbr.rel target = $region3
    $region8: #{tpu_custom_call.1} parent=1 // loop_exit
      _
    %1570 = vsyncpa [#allocation3], 1
    %s1571 = scalar_lea.sflag [#allocation3], 1
    %1572 = vsyncpa %s1571, 1
    %1573 = vsyncpa [#allocation6], 1
    %s1574 = scalar_lea.sflag [#allocation6], 1
    %1575 = vsyncpa %s1574, 1
    %1576 = vsyncpa [#allocation9], 1
    %1577 = vsyncpa [#allocation4], 1
    %s1578 = scalar_lea.sflag [#allocation4], 1
    %1579 = vsyncpa %s1578, 1

</llo_original>
